<compile_context>
chip_gen: v7x
topology: tpu7x:2x2x1
jax: 0.10.0
libtpu: 0.0.40
codegen_flags: <defaults>
</compile_context>

<pallas_src>
import functools
import math

import jax
import jax.numpy as jnp
from jax.experimental import pallas as pl
from jax.experimental.pallas import tpu as pltpu


BN_EPS = 1e-5
C1_PAD = 128    # conv1 output channels padded 64 -> 128 (lane-dense h1)
C3 = 1024       # conv3 output channels


def _vmem_capacity_bytes():
    try:
        return int(pltpu.get_tpu_info().vmem_capacity_bytes)
    except Exception:
        return 64 << 20  # conservative default: v7x per-TensorCore VMEM


_VMEM_CAP = _vmem_capacity_bytes()
# Larger tiles amortize the ~0.35us per-grid-step overhead and the w3 RHS re-push into
# the MXU.  128 MiB parts (v5e/v6e) comfortably fit tile_f=4096 (h3 f32 = 16 MiB); on
# 64 MiB v7x stay at 2048 (~10 MiB resident incl. bf16 intermediates + weights).
_TILE_F_CAP = 4096 if _VMEM_CAP >= (100 << 20) else 2048
_VMEM_LIMIT = min((_VMEM_CAP * 3) // 4, 96 << 20)


# ----------------------------------------------------------------------------
# Descriptor extraction (glue, plain JAX) — mirrors extract_feature_A
# ----------------------------------------------------------------------------
def vlen(q):
    # torch.norm(q, p=2, dim=2, keepdim=True)
    return jnp.sqrt(jnp.sum(q * q, axis=2, keepdims=True))


def angle_between_batch(v1, v2):
    v1n = v1 / (1e-08 + vlen(v1))
    v2n = v2 / (1e-08 + vlen(v2))
    dot = jnp.sum(v1n * v2n, axis=2, keepdims=True)
    return jnp.arccos(jnp.clip(dot, -1.0, 1.0))


def extract_feature_A(points, norms, f_num, key):
    p_num = points.shape[1]
    idx = jax.random.randint(key, (f_num, 3), 0, p_num)
    idx0 = jnp.repeat(jnp.arange(p_num), f_num // p_num)  # [0]*m + [1]*m + ...
    p1, p2 = points[:, idx0], points[:, idx[:, 1]]
    n1, n2 = norms[:, idx0], norms[:, idx[:, 1]]
    dis1 = vlen(p1 - p2)
    ang1a = angle_between_batch(p1 - p2, n1)
    ang1b = angle_between_batch(p2 - p1, n2)
    ang1c = angle_between_batch(n1, n2)
    return jnp.concatenate([dis1, ang1a, ang1b, ang1c], axis=2)  # (B, f_num, 4)


# ----------------------------------------------------------------------------
# Fused Pallas kernel: encoder (3 convs + folded BN + relu) + global max pool
# ----------------------------------------------------------------------------
def encoder_kernel(x_ref,
                   w1_ref, b1_ref, w2_ref, b2_ref, w3_ref, b3_ref,
                   xg_ref,
                   gmax_ref,
                   *, n_inp, tile_f, f_actual, need_mask):
    ft = pl.program_id(2)
    n_ft = pl.num_programs(2)

    # gmax scratch carries the running max across the innermost ("arbitrary") axis.
    @pl.when(ft == 0)
    def _init():
        gmax_ref[...] = jnp.full(gmax_ref.shape, -jnp.inf, gmax_ref.dtype)

    x = x_ref[0]                                          # (tile_f, n_inp) f32

    # conv1 + BN + relu: contraction of 4 is too narrow for the MXU -> VPU FMAs into a
    # 128-lane zero-padded output (free filler under the MXU-bound conv3).
    h1 = b1_ref[...]                                      # (1, C1_PAD)
    for c in range(n_inp):                                # unrolled, VPU only
        h1 = h1 + x[:, c:c + 1] * w1_ref[c:c + 1, :]
    h1 = jnp.maximum(h1, 0.0).astype(jnp.bfloat16)        # (tile_f, C1_PAD)

    # conv2 + BN + relu (bf16 inputs, f32 accumulation on the MXU)
    h2 = jnp.maximum(
        jnp.dot(h1, w2_ref[...], preferred_element_type=jnp.float32) + b2_ref[...],
        0.0).astype(jnp.bfloat16)                         # (tile_f, 128)

    # conv3 + BN (dominant matmul; bf16 inputs, f32 accumulation)
    h3 = jnp.dot(h2, w3_ref[...], preferred_element_type=jnp.float32) + b3_ref[...]
    # (tile_f, C3) f32

    if need_mask:
        # cdiv-padded last tile: force rows beyond the true feature count to -inf so
        # relu'd garbage from pad rows cannot leak into the global max.
        base = (pl.program_id(1) * n_ft + ft) * tile_f
        row = jax.lax.broadcasted_iota(jnp.int32, (tile_f, 1), 0)
        h3 = jnp.where(base + row < f_actual, h3, -jnp.inf)

    # Global max pool: vreg tree-reduce (O(log) depth) accumulated into the scratch.
    m_tile = jnp.max(h3.reshape(tile_f // 8, 8, C3), axis=0)   # (8, C3)
    gmax_ref[...] = jnp.maximum(gmax_ref[...], m_tile)

    @pl.when(ft == n_ft - 1)
    def _finalize():
        xg_ref[0] = jnp.max(gmax_ref[...], axis=0, keepdims=True)   # (1, C3), lane-dense


def _round_up(a, m):
    return ((a + m - 1) // m) * m


# ----------------------------------------------------------------------------
# Parameter init (deterministic, synthetic; PyTorch-default BN stats in eval mode)
# ----------------------------------------------------------------------------
def init_params(key, inp=4, k=2):
    ks = jax.random.split(key, 12)

    def w(kk, shape, scale=0.1):
        return scale * jax.random.normal(kk, shape, jnp.float32)

    return dict(
        # Encoder_slim conv weights stored as (Cin, Cout) for position-major matmul
        w1=w(ks[0], (inp, 64)),    b1=w(ks[1], (64,)),
        w2=w(ks[2], (64, 128)),    b2=w(ks[3], (128,)),
        w3=w(ks[4], (128, 1024)),  b3=w(ks[5], (1024,)),
        # classifier head, stored as (in, out)
        fw1=w(ks[6], (1024, 512)), fb1=w(ks[7], (512,)),
        fw2=w(ks[8], (512, 256)),  fb2=w(ks[9], (256,)),
        fw3=w(ks[10], (256, k)),   fb3=w(ks[11], (k,)),
    )


# ----------------------------------------------------------------------------
# Forward wrapper
# ----------------------------------------------------------------------------
@functools.partial(jax.jit, static_argnames=("feature_num", "tile_f_cap"))
def triangle_net_forward(points, norms, params, feature_num, idx_key, tile_f_cap=None):
    B, P, _ = points.shape
    F = feature_num
    assert F % P == 0, "feature_num must be divisible by n_points (module's .view contract)"
    inp = params["w1"].shape[0]
    c1 = params["w1"].shape[1]

    x = extract_feature_A(points, norms, F, idx_key)       # (B, F, inp) f32

    # Fold eval-mode BatchNorm (mean=0, var=1, gamma=1, beta=0, eps=1e-5) into weights.
    s = 1.0 / math.sqrt(1.0 + BN_EPS)

    # conv1: zero-pad 64 -> 128 output channels (lane-dense h1); stays f32 (VPU path).
    w1p = jnp.zeros((inp, C1_PAD), jnp.float32).at[:, :c1].set(params["w1"] * s)
    b1p = jnp.zeros((1, C1_PAD), jnp.float32).at[0, :c1].set(params["b1"] * s)
    # conv2: zero-pad input rows to 128; bf16 weights for the MXU (BN folded before cast).
    w2p = (jnp.zeros((C1_PAD, params["w2"].shape[1]), jnp.float32)
           .at[:c1, :].set(params["w2"] * s)).astype(jnp.bfloat16)
    b2p = (params["b2"] * s).reshape(1, -1)
    # conv3: bf16 weights, f32 bias.
    w3p = (params["w3"] * s).astype(jnp.bfloat16)
    b3p = (params["b3"] * s).reshape(1, -1)

    # --- F tiling: cdiv + masked last tile (tile_f independent of F's factorisation) ---
    cap = _TILE_F_CAP if tile_f_cap is None else tile_f_cap
    tile_f = min(cap, _round_up(F, 8))
    n_ft_total = pl.cdiv(F, tile_f)
    # Split the F axis into 2 "parallel" chunks when B alone can't fill both v7x
    # TensorCores (small / odd B).  Harmless on single-TC v5e/v6e.
    n_splits = 2 if (B % 2 == 1 and n_ft_total >= 2) else 1
    n_ft = pl.cdiv(n_ft_total, n_splits)
    f_pad = n_splits * n_ft * tile_f
    x_pad = jnp.pad(x, ((0, 0), (0, f_pad - F), (0, 0)))

    weights = (w1p, b1p, w2p, b2p, w3p, b3p)
    flops = 2 * B * f_pad * (inp * C1_PAD + C1_PAD * w2p.shape[1] + 128 * C3)
    bytes_accessed = (int(x_pad.size) * 4
                      + sum(int(w.size) * w.dtype.itemsize for w in weights)
                      + B * n_splits * C3 * 4)

    xg = pl.pallas_call(
        functools.partial(encoder_kernel, n_inp=inp, tile_f=tile_f,
                          f_actual=F, need_mask=f_pad > F),
        out_shape=jax.ShapeDtypeStruct((B, n_splits, C3), jnp.float32),
        grid=(B, n_splits, n_ft),
        in_specs=[
            pl.BlockSpec((1, tile_f, inp), lambda b, sp, t: (b, sp * n_ft + t, 0)),
            pl.BlockSpec((inp, C1_PAD), lambda b, sp, t: (0, 0)),
            pl.BlockSpec((1, C1_PAD), lambda b, sp, t: (0, 0)),
            pl.BlockSpec((C1_PAD, 128), lambda b, sp, t: (0, 0)),
            pl.BlockSpec((1, 128), lambda b, sp, t: (0, 0)),
            pl.BlockSpec((128, C3), lambda b, sp, t: (0, 0)),
            pl.BlockSpec((1, C3), lambda b, sp, t: (0, 0)),
        ],
        out_specs=pl.BlockSpec((1, 1, C3), lambda b, sp, t: (b, sp, 0)),
        scratch_shapes=[pltpu.VMEM((8, C3), jnp.float32)],
        compiler_params=pltpu.CompilerParams(
            # Innermost axis must stay "arbitrary" (sequential): the gmax scratch carry
            # + ft==0 re-init depend on it.  B / F-split axes are "parallel" (megacore).
            dimension_semantics=("parallel", "parallel", "arbitrary"),
            vmem_limit_bytes=_VMEM_LIMIT),
        cost_estimate=pl.CostEstimate(flops=flops, transcendentals=0,
                                      bytes_accessed=bytes_accessed),
    )(x_pad, *weights)

    x_global = jnp.max(xg, axis=1)                          # (B, 1024)

    # Classifier head (fc1+bn1+relu, fc2+dropout(eval)+bn2+relu, fc3, log_softmax) in
    # plain XLA: batched M=B matmuls, negligible FLOPs, keeps head weights out of the
    # kernel's resident VMEM and off the per-tile critical path.
    g = jax.nn.relu(x_global @ (params["fw1"] * s) + params["fb1"] * s)
    g = jax.nn.relu(g @ (params["fw2"] * s) + params["fb2"] * s)
    logits = g @ params["fw3"] + params["fb3"]
    return jax.nn.log_softmax(logits, axis=1), x_global


# ----------------------------------------------------------------------------
# Pure-JAX reference (same eval semantics and same bf16-on-MXU precision policy)
# ----------------------------------------------------------------------------
def reference_forward(points, norms, params, feature_num, idx_key, mxu_bf16=True):
    B, P, _ = points.shape
    F = feature_num
    M = F // P
    s = 1.0 / math.sqrt(1.0 + BN_EPS)

    def mm(a, w):
        if mxu_bf16:
            return jnp.dot(a.astype(jnp.bfloat16), w.astype(jnp.bfloat16),
                           preferred_element_type=jnp.float32)
        return jnp.dot(a, w, preferred_element_type=jnp.float32)

    x = extract_feature_A(points, norms, F, idx_key)
    h = jax.nn.relu(x @ (params["w1"] * s) + params["b1"] * s)
    h = jax.nn.relu(mm(h, params["w2"] * s) + params["b2"] * s)
    h = mm(h, params["w3"] * s) + params["b3"] * s               # (B, F, 1024)
    x_point = h.reshape(B, P, M, 1024).max(axis=2)               # (B, P, 1024)
    x_global = x_point.max(axis=1)                               # (B, 1024)
    g = jax.nn.relu(x_global @ (params["fw1"] * s) + params["fb1"] * s)
    g = jax.nn.relu(g @ (params["fw2"] * s) + params["fb2"] * s)
    logits = g @ params["fw3"] + params["fb3"]
    return jax.nn.log_softmax(logits, axis=1), x_global


if __name__ == "__main__":
    key = jax.random.PRNGKey(0)
    k_pts, k_nrm, k_par, k_idx = jax.random.split(key, 4)
    params = init_params(k_par, inp=4, k=2)

    # Case 1: B=2, small F — single tile, no padding, no F split (B-parallel only).
    batch, n_points, feature_num = 2, 8, 256
    points = jax.random.normal(k_pts, (batch, n_points, 3), jnp.float32)
    norms = jax.random.normal(k_nrm, (batch, n_points, 3), jnp.float32)

    logp, x_global = triangle_net_forward(points, norms, params,
                                          feature_num=feature_num, idx_key=k_idx,
                                          tile_f_cap=None)
    logp, x_global = jax.block_until_ready((logp, x_global))
    ref_logp, ref_xg = reference_forward(points, norms, params, feature_num, k_idx)
    assert logp.shape == (batch, 2) and x_global.shape == (batch, 1024)
    assert jnp.allclose(logp, ref_logp, rtol=1e-2, atol=1e-2), \
        float(jnp.max(jnp.abs(logp - ref_logp)))
    assert jnp.allclose(x_global, ref_xg, rtol=1e-2, atol=1e-2), \
        float(jnp.max(jnp.abs(x_global - ref_xg)))

    # Case 2: B=1, F=1000 with a forced small tile cap — exercises the cdiv + masked
    # last tile path AND the F-split-across-parallel-chunks path (v7x small-batch).
    b2, f2 = 1, 1000
    pts2 = jax.random.normal(jax.random.fold_in(k_pts, 1), (b2, n_points, 3), jnp.float32)
    nrm2 = jax.random.normal(jax.random.fold_in(k_nrm, 1), (b2, n_points, 3), jnp.float32)
    logp2, xg2 = triangle_net_forward(pts2, nrm2, params,
                                      feature_num=f2, idx_key=k_idx, tile_f_cap=512)
    logp2, xg2 = jax.block_until_ready((logp2, xg2))
    ref_logp2, ref_xg2 = reference_forward(pts2, nrm2, params, f2, k_idx)
    assert logp2.shape == (b2, 2) and xg2.shape == (b2, 1024)
    assert jnp.allclose(logp2, ref_logp2, rtol=1e-2, atol=1e-2), \
        float(jnp.max(jnp.abs(logp2 - ref_logp2)))
    assert jnp.allclose(xg2, ref_xg2, rtol=1e-2, atol=1e-2), \
        float(jnp.max(jnp.abs(xg2 - ref_xg2)))

    print("KERNEL_OK")
</pallas_src>

<mosaic_0001>
module attributes {stable_mosaic.version = 11 : i64} {
  func.func @encoder_kernel(%arg0: i32, %arg1: i32, %arg2: i32, %arg3: memref<1x256x4xf32, #tpu.memory_space<vmem>>, %arg4: memref<4x128xf32, #tpu.memory_space<vmem>>, %arg5: memref<1x128xf32, #tpu.memory_space<vmem>>, %arg6: memref<128x128xbf16, #tpu.memory_space<vmem>>, %arg7: memref<1x128xf32, #tpu.memory_space<vmem>>, %arg8: memref<128x1024xbf16, #tpu.memory_space<vmem>>, %arg9: memref<1x1024xf32, #tpu.memory_space<vmem>>, %arg10: memref<1x1x1024xf32, #tpu.memory_space<vmem>>, %arg11: memref<8x1024xf32, #tpu.memory_space<vmem>>) attributes {dimension_semantics = [#tpu.dimension_semantics<parallel>, #tpu.dimension_semantics<parallel>, #tpu.dimension_semantics<arbitrary>], iteration_bounds = array<i64: 2, 1, 1>, scalar_prefetch = 0 : i64, scratch_operands = 1 : i64, tpu.core_type = #tpu.core_type<tc>, window_params = [{transform_indices = @transform_0, window_bounds = array<i64: 1, 256, 4>}, {pipeline_mode = #tpu.pipeline_mode<synchronous>, transform_indices = @transform_1, window_bounds = array<i64: 4, 128>}, {pipeline_mode = #tpu.pipeline_mode<synchronous>, transform_indices = @transform_2, window_bounds = array<i64: 1, 128>}, {pipeline_mode = #tpu.pipeline_mode<synchronous>, transform_indices = @transform_3, window_bounds = array<i64: 128, 128>}, {pipeline_mode = #tpu.pipeline_mode<synchronous>, transform_indices = @transform_4, window_bounds = array<i64: 1, 128>}, {pipeline_mode = #tpu.pipeline_mode<synchronous>, transform_indices = @transform_5, window_bounds = array<i64: 128, 1024>}, {pipeline_mode = #tpu.pipeline_mode<synchronous>, transform_indices = @transform_6, window_bounds = array<i64: 1, 1024>}, {transform_indices = @transform_7, window_bounds = array<i64: 1, 1, 1024>}]} {
    %c0_i32 = arith.constant 0 : i32
    %0 = arith.cmpi eq, %arg2, %c0_i32 : i32
    %1 = arith.extui %0 : i1 to i32
    %c0_i32_0 = arith.constant 0 : i32
    %2 = arith.cmpi ne, %1, %c0_i32_0 : i32
    scf.if %2 {
      %cst_28 = arith.constant 0xFF800000 : f32
      %55 = vector.broadcast %cst_28 : f32 to vector<8x1024xf32>
      %c0_29 = arith.constant 0 : index
      %c0_30 = arith.constant 0 : index
      %56 = vector.load %arg11[%c0_29, %c0_30] : memref<8x1024xf32, #tpu.memory_space<vmem>>, vector<8x1024xf32>
      tpu.vector_store %arg11[%c0_29, %c0_30], %55 {strides = array<i32>} : memref<8x1024xf32, #tpu.memory_space<vmem>>, vector<8x1024xf32>,
    } else {
    }
    %c0 = arith.constant 0 : index
    %c0_1 = arith.constant 0 : index
    %c0_2 = arith.constant 0 : index
    %3 = vector.load %arg3[%c0, %c0_1, %c0_2] : memref<1x256x4xf32, #tpu.memory_space<vmem>>, vector<1x256x4xf32>
    %4 = vector.shape_cast %3 : vector<1x256x4xf32> to vector<256x4xf32>
    %c0_3 = arith.constant 0 : index
    %c0_4 = arith.constant 0 : index
    %5 = vector.load %arg5[%c0_3, %c0_4] : memref<1x128xf32, #tpu.memory_space<vmem>>, vector<1x128xf32>
    %6 = vector.extract_strided_slice %4 {offsets = [0, 0], sizes = [256, 1], strides = [1, 1]} : vector<256x4xf32> to vector<256x1xf32>
    %c0_5 = arith.constant 0 : index
    %c0_6 = arith.constant 0 : index
    %7 = vector.load %arg4[%c0_5, %c0_6] : memref<4x128xf32, #tpu.memory_space<vmem>>, vector<1x128xf32>
    %8 = vector.broadcast %6 : vector<256x1xf32> to vector<256x128xf32>
    %9 = vector.broadcast %7 : vector<1x128xf32> to vector<256x128xf32>
    %10 = arith.mulf %8, %9 : vector<256x128xf32>
    %11 = vector.broadcast %5 : vector<1x128xf32> to vector<256x128xf32>
    %12 = arith.addf %11, %10 : vector<256x128xf32>
    %13 = vector.extract_strided_slice %4 {offsets = [0, 1], sizes = [256, 1], strides = [1, 1]} : vector<256x4xf32> to vector<256x1xf32>
    %c1 = arith.constant 1 : index
    %c0_7 = arith.constant 0 : index
    %14 = vector.load %arg4[%c1, %c0_7] : memref<4x128xf32, #tpu.memory_space<vmem>>, vector<1x128xf32>
    %15 = vector.broadcast %13 : vector<256x1xf32> to vector<256x128xf32>
    %16 = vector.broadcast %14 : vector<1x128xf32> to vector<256x128xf32>
    %17 = arith.mulf %15, %16 : vector<256x128xf32>
    %18 = arith.addf %12, %17 : vector<256x128xf32>
    %19 = vector.extract_strided_slice %4 {offsets = [0, 2], sizes = [256, 1], strides = [1, 1]} : vector<256x4xf32> to vector<256x1xf32>
    %c2 = arith.constant 2 : index
    %c0_8 = arith.constant 0 : index
    %20 = vector.load %arg4[%c2, %c0_8] : memref<4x128xf32, #tpu.memory_space<vmem>>, vector<1x128xf32>
    %21 = vector.broadcast %19 : vector<256x1xf32> to vector<256x128xf32>
    %22 = vector.broadcast %20 : vector<1x128xf32> to vector<256x128xf32>
    %23 = arith.mulf %21, %22 : vector<256x128xf32>
    %24 = arith.addf %18, %23 : vector<256x128xf32>
    %25 = vector.extract_strided_slice %4 {offsets = [0, 3], sizes = [256, 1], strides = [1, 1]} : vector<256x4xf32> to vector<256x1xf32>
    %c3 = arith.constant 3 : index
    %c0_9 = arith.constant 0 : index
    %26 = vector.load %arg4[%c3, %c0_9] : memref<4x128xf32, #tpu.memory_space<vmem>>, vector<1x128xf32>
    %27 = vector.broadcast %25 : vector<256x1xf32> to vector<256x128xf32>
    %28 = vector.broadcast %26 : vector<1x128xf32> to vector<256x128xf32>
    %29 = arith.mulf %27, %28 : vector<256x128xf32>
    %30 = arith.addf %24, %29 : vector<256x128xf32>
    %cst = arith.constant 0.000000e+00 : f32
    %31 = vector.broadcast %cst : f32 to vector<256x128xf32>
    %32 = arith.maximumf %30, %31 : vector<256x128xf32>
    %33 = arith.truncf %32 : vector<256x128xf32> to vector<256x128xbf16>
    %c0_10 = arith.constant 0 : index
    %c0_11 = arith.constant 0 : index
    %34 = vector.load %arg6[%c0_10, %c0_11] : memref<128x128xbf16, #tpu.memory_space<vmem>>, vector<128x128xbf16>
    %cst_12 = arith.constant dense<0.000000e+00> : vector<256x128xf32>
    %35 = tpu.matmul %33, %34, %cst_12 {dimension_numbers = #tpu.dot_dimension_numbers<[1], [0], [0], [1], [0, 0, 1, 1], [], []>} : vector<256x128xbf16>, vector<128x128xbf16>, vector<256x128xf32> -> vector<256x128xf32>
    %c0_13 = arith.constant 0 : index
    %c0_14 = arith.constant 0 : index
    %36 = vector.load %arg7[%c0_13, %c0_14] : memref<1x128xf32, #tpu.memory_space<vmem>>, vector<1x128xf32>
    %37 = vector.broadcast %36 : vector<1x128xf32> to vector<256x128xf32>
    %38 = arith.addf %35, %37 : vector<256x128xf32>
    %cst_15 = arith.constant 0.000000e+00 : f32
    %39 = vector.broadcast %cst_15 : f32 to vector<256x128xf32>
    %40 = arith.maximumf %38, %39 : vector<256x128xf32>
    %41 = arith.truncf %40 : vector<256x128xf32> to vector<256x128xbf16>
    %c0_16 = arith.constant 0 : index
    %c0_17 = arith.constant 0 : index
    %42 = vector.load %arg8[%c0_16, %c0_17] : memref<128x1024xbf16, #tpu.memory_space<vmem>>, vector<128x1024xbf16>
    %cst_18 = arith.constant dense<0.000000e+00> : vector<256x1024xf32>
    %43 = tpu.matmul %41, %42, %cst_18 {dimension_numbers = #tpu.dot_dimension_numbers<[1], [0], [0], [1], [0, 0, 1, 1], [], []>} : vector<256x128xbf16>, vector<128x1024xbf16>, vector<256x1024xf32> -> vector<256x1024xf32>
    %c0_19 = arith.constant 0 : index
    %c0_20 = arith.constant 0 : index
    %44 = vector.load %arg9[%c0_19, %c0_20] : memref<1x1024xf32, #tpu.memory_space<vmem>>, vector<1x1024xf32>
    %45 = vector.broadcast %44 : vector<1x1024xf32> to vector<256x1024xf32>
    %46 = arith.addf %43, %45 : vector<256x1024xf32>
    %47 = vector.shape_cast %46 : vector<256x1024xf32> to vector<32x8x1024xf32>
    %cst_21 = arith.constant dense<0xFF800000> : vector<8x1024xf32>
    %48 = vector.multi_reduction <maximumf>, %47, %cst_21 [0] : vector<32x8x1024xf32> to vector<8x1024xf32>
    %c0_22 = arith.constant 0 : index
    %c0_23 = arith.constant 0 : index
    %49 = vector.load %arg11[%c0_22, %c0_23] : memref<8x1024xf32, #tpu.memory_space<vmem>>, vector<8x1024xf32>
    %50 = arith.maximumf %49, %48 : vector<8x1024xf32>
    %c0_24 = arith.constant 0 : index
    %c0_25 = arith.constant 0 : index
    %51 = vector.load %arg11[%c0_24, %c0_25] : memref<8x1024xf32, #tpu.memory_space<vmem>>, vector<8x1024xf32>
    tpu.vector_store %arg11[%c0_24, %c0_25], %50 {strides = array<i32>} : memref<8x1024xf32, #tpu.memory_space<vmem>>, vector<8x1024xf32>,
    %c0_i32_26 = arith.constant 0 : i32
    %52 = arith.cmpi eq, %arg2, %c0_i32_26 : i32
    %53 = arith.extui %52 : i1 to i32
    %c0_i32_27 = arith.constant 0 : i32
    %54 = arith.cmpi ne, %53, %c0_i32_27 : i32
    scf.if %54 {
      %c0_28 = arith.constant 0 : index
      %c0_29 = arith.constant 0 : index
      %55 = vector.load %arg11[%c0_28, %c0_29] : memref<8x1024xf32, #tpu.memory_space<vmem>>, vector<8x1024xf32>
      %cst_30 = arith.constant dense<0xFF800000> : vector<1024xf32>
      %56 = vector.multi_reduction <maximumf>, %55, %cst_30 [0] : vector<8x1024xf32> to vector<1024xf32>
      %57 = vector.shape_cast %56 : vector<1024xf32> to vector<1x1024xf32>
      %c0_31 = arith.constant 0 : index
      %c0_32 = arith.constant 0 : index
      %c0_33 = arith.constant 0 : index
      %58 = vector.load %arg10[%c0_31, %c0_32, %c0_33] : memref<1x1x1024xf32, #tpu.memory_space<vmem>>, vector<1x1x1024xf32>
      %59 = vector.shape_cast %58 : vector<1x1x1024xf32> to vector<1x1024xf32>
      %60 = vector.shape_cast %57 : vector<1x1024xf32> to vector<1x1x1024xf32>
      tpu.vector_store %arg10[%c0_31, %c0_32, %c0_33], %60 {strides = array<i32>} : memref<1x1x1024xf32, #tpu.memory_space<vmem>>, vector<1x1x1024xf32>,
    } else {
    }
    return
  }
  func.func @transform_0(%arg0: i32, %arg1: i32, %arg2: i32) -> (i32, i32, i32) {
    %c1_i32 = arith.constant 1 : i32
    %0 = arith.muli %arg1, %c1_i32 : i32
    %1 = arith.addi %0, %arg2 : i32
    %c0_i32 = arith.constant 0 : i32
    %c0_i32_0 = arith.constant 0 : i32
    return %arg0, %1, %c0_i32 : i32, i32, i32
  }
  func.func @transform_1(%arg0: i32, %arg1: i32, %arg2: i32) -> (i32, i32) {
    %c0_i32 = arith.constant 0 : i32
    %c0_i32_0 = arith.constant 0 : i32
    %c0_i32_1 = arith.constant 0 : i32
    return %c0_i32, %c0_i32_0 : i32, i32
  }
  func.func @transform_2(%arg0: i32, %arg1: i32, %arg2: i32) -> (i32, i32) {
    %c0_i32 = arith.constant 0 : i32
    %c0_i32_0 = arith.constant 0 : i32
    %c0_i32_1 = arith.constant 0 : i32
    return %c0_i32, %c0_i32_0 : i32, i32
  }
  func.func @transform_3(%arg0: i32, %arg1: i32, %arg2: i32) -> (i32, i32) {
    %c0_i32 = arith.constant 0 : i32
    %c0_i32_0 = arith.constant 0 : i32
    %c0_i32_1 = arith.constant 0 : i32
    return %c0_i32, %c0_i32_0 : i32, i32
  }
  func.func @transform_4(%arg0: i32, %arg1: i32, %arg2: i32) -> (i32, i32) {
    %c0_i32 = arith.constant 0 : i32
    %c0_i32_0 = arith.constant 0 : i32
    %c0_i32_1 = arith.constant 0 : i32
    return %c0_i32, %c0_i32_0 : i32, i32
  }
  func.func @transform_5(%arg0: i32, %arg1: i32, %arg2: i32) -> (i32, i32) {
    %c0_i32 = arith.constant 0 : i32
    %c0_i32_0 = arith.constant 0 : i32
    %c0_i32_1 = arith.constant 0 : i32
    return %c0_i32, %c0_i32_0 : i32, i32
  }
  func.func @transform_6(%arg0: i32, %arg1: i32, %arg2: i32) -> (i32, i32) {
    %c0_i32 = arith.constant 0 : i32
    %c0_i32_0 = arith.constant 0 : i32
    %c0_i32_1 = arith.constant 0 : i32
    return %c0_i32, %c0_i32_0 : i32, i32
  }
  func.func @transform_7(%arg0: i32, %arg1: i32, %arg2: i32) -> (i32, i32, i32) {
    %c0_i32 = arith.constant 0 : i32
    %c0_i32_0 = arith.constant 0 : i32
    return %arg0, %arg1, %c0_i32 : i32, i32, i32
  }
}

</mosaic_0001>

<llo_original>
// kernel: triangle_net_forward.1
$region0: #{triangle_net_forward.1}
  #allocation0 [shape = 'u32[]', space=smem, size = 0x4, offset = 0x4, fixed_abs, tag = 'smem constant byte address 0x4 - core index']
  #allocation1 [shape = 'u32[144,128]{1,0:T(1,128)}', space=vmem, size = 0x12000, scoped, tag = 'internal scratch']
  #allocation2 [shape = 'f32[8,1024]{1,0:T(8,128)}', space=vmem, size = 0x8000, scoped, tag = 'scratch operand']
  %s0 = inlined_call_operand.vmem [shape: f32[2,256,4], index: 0, kind: input, shape index: {}]
  %s1 = inlined_call_operand.vmem [shape: f32[4,128], index: 1, kind: input, shape index: {}]
  %s2 = inlined_call_operand.vmem [shape: f32[1,128], index: 2, kind: input, shape index: {}]
  %s3 = inlined_call_operand.vmem [shape: bf16[128,128], index: 3, kind: input, shape index: {}]
  %s4 = inlined_call_operand.vmem [shape: f32[1,128], index: 4, kind: input, shape index: {}]
  %s5 = inlined_call_operand.vmem [shape: bf16[128,1024], index: 5, kind: input, shape index: {}]
  %s6 = inlined_call_operand.vmem [shape: f32[1,1024], index: 6, kind: input, shape index: {}]
  %s7 = inlined_call_operand.vmem [shape: f32[2,1,1024], index: 7, kind: output, shape index: {}]
  %s8 = sld [smem:[#allocation0]]
  $region69: #{triangle_net_forward.1} parent=0
    _
  %s10 = ssub.s32 1, %s8
  %s11 = scalar_select 0, %s10, %s8
  loop: start=0, step=1, limit=4
  $region2: #{triangle_net_forward.1} parent=0 // loop_pre_header
    _
  $region3: #{triangle_net_forward.1} parent=0 // loop_header
    %s13 = sphi 0, %s17
    %p14 = scmp.ge.s32.totalorder %s13, 4
    %s20 = sphi 0, %s39
    %s21 = sphi 0, %s35
    %s22 = sphi 0, %s31
    %s23 = sphi 0, %s20
    %s24 = sphi 0, %s21
    %s25 = sphi 0, %s22
    %s26 = sphi 0, %s23
    %s27 = sphi 0, %s24
    %s28 = sphi 0, %s25
    %s46 = sphi 0, %s48
    %s49 = sphi 0, %s46
    %s50 = sphi 0, %s49
    %s66 = sphi 0, %s50
    %s70 = sphi 0, %s70
    %s72 = sphi 0, %s70
    %s73 = sphi 0, %s72
    %s87 = sphi 0, %s73
    %s91 = sphi 0, %s91
    %s93 = sphi 0, %s91
    %s94 = sphi 0, %s93
    %s108 = sphi 0, %s94
    %s112 = sphi 0, %s112
    %s114 = sphi 0, %s112
    %s115 = sphi 0, %s114
    %s129 = sphi 0, %s115
    %s133 = sphi 0, %s133
    %s135 = sphi 0, %s133
    %s136 = sphi 0, %s135
    %s150 = sphi 0, %s136
    %s154 = sphi 0, %s154
    %s156 = sphi 0, %s154
    %s157 = sphi 0, %s156
    %s171 = sphi 0, %s157
    %s175 = sphi 0, %s175
    %s177 = sphi 0, %s175
    %s178 = sphi 0, %s177
    %s192 = sphi 0, %s178
    %s200 = sphi 0, %s202
    %s203 = sphi 0, %s200
    %s204 = sphi 0, %s203
    %s220 = sphi 0, %s204
  $region4: #{triangle_net_forward.1} parent=0 // loop_header_branch
    %16 = sbr.rel (%p14) target = $region8
  $region5: #{triangle_net_forward.1} parent=0 // loop_body
    %s18 = ssub.s32 %s13, 1
    %s19 = ssub.s32 %s13, 2
    %s29 = sadd.s32 1, %s22
    %p30 = scmp.ge.s32.totalorder %s29, 1
    %s31 = scalar_select %p30, 0, %s29
    %s32 = sadd.s32 1, %s21
    %s33 = scalar_select %p30, %s32, %s21
    %p34 = scmp.ge.s32.totalorder %s33, 1
    %s35 = scalar_select %p34, 0, %s33
    %s36 = sadd.s32 1, %s20
    %s37 = scalar_select %p34, %s36, %s20
    %p38 = scmp.ge.s32.totalorder %s37, 2
    %s39 = scalar_select %p38, 0, %s37
    %s40 = sadd.s32 %s21, %s22
    %s41 = sadd.s32 %s35, %s31
    %s42 = ssub.s32 %s20, %s39
    %s43 = ssub.s32 %s40, %s41
    %s44 = sor.u32 %s42, %s43
    %p45 = scmp.eq.s32.totalorder %s44, 0
    %s47 = sadd.s32 %s46, 1
    %s48 = scalar_select %p45, %s46, %s47
    %p51 = pneg %p45
    %p52 = scmp.eq.s32.totalorder %s13, 1
    %p53 = por %p51, %p52
    %p54 = scmp.ne.s32.totalorder %s46, %s49
    %p55 = scmp.eq.s32.totalorder %s13, 0
    %p56 = por %p54, %p55
    %p57 = scmp.ne.s32.totalorder %s46, %s49
    %p58 = scmp.eq.s32.totalorder %s18, 1
    %p59 = por %p57, %p58
    %p60 = scmp.ne.s32.totalorder %s49, %s50
    %p61 = scmp.eq.s32.totalorder %s18, 0
    %p62 = por %p60, %p61
    %p63 = scmp.ne.s32.totalorder %s49, %s50
    %p64 = scmp.eq.s32.totalorder %s19, 1
    %p65 = por %p63, %p64
    %p67 = scmp.ne.s32.totalorder %s50, %s66
    %p68 = scmp.eq.s32.totalorder %s19, 0
    %p69 = por %p67, %p68
    %s71 = sadd.s32 %s70, 1
    %p74 = scmp.eq.s32.totalorder %s13, 1
    %p75 = scmp.ne.s32.totalorder %s70, %s72
    %p76 = scmp.eq.s32.totalorder %s13, 0
    %p77 = por %p75, %p76
    %p78 = scmp.ne.s32.totalorder %s70, %s72
    %p79 = scmp.eq.s32.totalorder %s18, 1
    %p80 = por %p78, %p79
    %p81 = scmp.ne.s32.totalorder %s72, %s73
    %p82 = scmp.eq.s32.totalorder %s18, 0
    %p83 = por %p81, %p82
    %p84 = scmp.ne.s32.totalorder %s72, %s73
    %p85 = scmp.eq.s32.totalorder %s19, 1
    %p86 = por %p84, %p85
    %p88 = scmp.ne.s32.totalorder %s73, %s87
    %p89 = scmp.eq.s32.totalorder %s19, 0
    %p90 = por %p88, %p89
    %s92 = sadd.s32 %s91, 1
    %p95 = scmp.eq.s32.totalorder %s13, 1
    %p96 = scmp.ne.s32.totalorder %s91, %s93
    %p97 = scmp.eq.s32.totalorder %s13, 0
    %p98 = por %p96, %p97
    %p99 = scmp.ne.s32.totalorder %s91, %s93
    %p100 = scmp.eq.s32.totalorder %s18, 1
    %p101 = por %p99, %p100
    %p102 = scmp.ne.s32.totalorder %s93, %s94
    %p103 = scmp.eq.s32.totalorder %s18, 0
    %p104 = por %p102, %p103
    %p105 = scmp.ne.s32.totalorder %s93, %s94
    %p106 = scmp.eq.s32.totalorder %s19, 1
    %p107 = por %p105, %p106
    %p109 = scmp.ne.s32.totalorder %s94, %s108
    %p110 = scmp.eq.s32.totalorder %s19, 0
    %p111 = por %p109, %p110
    %s113 = sadd.s32 %s112, 1
    %p116 = scmp.eq.s32.totalorder %s13, 1
    %p117 = scmp.ne.s32.totalorder %s112, %s114
    %p118 = scmp.eq.s32.totalorder %s13, 0
    %p119 = por %p117, %p118
    %p120 = scmp.ne.s32.totalorder %s112, %s114
    %p121 = scmp.eq.s32.totalorder %s18, 1
    %p122 = por %p120, %p121
    %p123 = scmp.ne.s32.totalorder %s114, %s115
    %p124 = scmp.eq.s32.totalorder %s18, 0
    %p125 = por %p123, %p124
    %p126 = scmp.ne.s32.totalorder %s114, %s115
    %p127 = scmp.eq.s32.totalorder %s19, 1
    %p128 = por %p126, %p127
    %p130 = scmp.ne.s32.totalorder %s115, %s129
    %p131 = scmp.eq.s32.totalorder %s19, 0
    %p132 = por %p130, %p131
    %s134 = sadd.s32 %s133, 1
    %p137 = scmp.eq.s32.totalorder %s13, 1
    %p138 = scmp.ne.s32.totalorder %s133, %s135
    %p139 = scmp.eq.s32.totalorder %s13, 0
    %p140 = por %p138, %p139
    %p141 = scmp.ne.s32.totalorder %s133, %s135
    %p142 = scmp.eq.s32.totalorder %s18, 1
    %p143 = por %p141, %p142
    %p144 = scmp.ne.s32.totalorder %s135, %s136
    %p145 = scmp.eq.s32.totalorder %s18, 0
    %p146 = por %p144, %p145
    %p147 = scmp.ne.s32.totalorder %s135, %s136
    %p148 = scmp.eq.s32.totalorder %s19, 1
    %p149 = por %p147, %p148
    %p151 = scmp.ne.s32.totalorder %s136, %s150
    %p152 = scmp.eq.s32.totalorder %s19, 0
    %p153 = por %p151, %p152
    %s155 = sadd.s32 %s154, 1
    %p158 = scmp.eq.s32.totalorder %s13, 1
    %p159 = scmp.ne.s32.totalorder %s154, %s156
    %p160 = scmp.eq.s32.totalorder %s13, 0
    %p161 = por %p159, %p160
    %p162 = scmp.ne.s32.totalorder %s154, %s156
    %p163 = scmp.eq.s32.totalorder %s18, 1
    %p164 = por %p162, %p163
    %p165 = scmp.ne.s32.totalorder %s156, %s157
    %p166 = scmp.eq.s32.totalorder %s18, 0
    %p167 = por %p165, %p166
    %p168 = scmp.ne.s32.totalorder %s156, %s157
    %p169 = scmp.eq.s32.totalorder %s19, 1
    %p170 = por %p168, %p169
    %p172 = scmp.ne.s32.totalorder %s157, %s171
    %p173 = scmp.eq.s32.totalorder %s19, 0
    %p174 = por %p172, %p173
    %s176 = sadd.s32 %s175, 1
    %p179 = scmp.eq.s32.totalorder %s13, 1
    %p180 = scmp.ne.s32.totalorder %s175, %s177
    %p181 = scmp.eq.s32.totalorder %s13, 0
    %p182 = por %p180, %p181
    %p183 = scmp.ne.s32.totalorder %s175, %s177
    %p184 = scmp.eq.s32.totalorder %s18, 1
    %p185 = por %p183, %p184
    %p186 = scmp.ne.s32.totalorder %s177, %s178
    %p187 = scmp.eq.s32.totalorder %s18, 0
    %p188 = por %p186, %p187
    %p189 = scmp.ne.s32.totalorder %s177, %s178
    %p190 = scmp.eq.s32.totalorder %s19, 1
    %p191 = por %p189, %p190
    %p193 = scmp.ne.s32.totalorder %s178, %s192
    %p194 = scmp.eq.s32.totalorder %s19, 0
    %p195 = por %p193, %p194
    %s196 = ssub.s32 %s20, %s39
    %s197 = ssub.s32 %s21, %s35
    %s198 = sor.u32 %s196, %s197
    %p199 = scmp.eq.s32.totalorder %s198, 0
    %s201 = sadd.s32 %s200, 1
    %s202 = scalar_select %p199, %s200, %s201
    %p205 = pneg %p199
    %p206 = scmp.eq.s32.totalorder %s13, 1
    %p207 = por %p205, %p206
    %p208 = scmp.ne.s32.totalorder %s200, %s203
    %p209 = scmp.eq.s32.totalorder %s13, 0
    %p210 = por %p208, %p209
    %p211 = scmp.ne.s32.totalorder %s200, %s203
    %p212 = scmp.eq.s32.totalorder %s18, 1
    %p213 = por %p211, %p212
    %p214 = scmp.ne.s32.totalorder %s203, %s204
    %p215 = scmp.eq.s32.totalorder %s18, 0
    %p216 = por %p214, %p215
    %p217 = scmp.ne.s32.totalorder %s203, %s204
    %p218 = scmp.eq.s32.totalorder %s19, 1
    %p219 = por %p217, %p218
    %p221 = scmp.ne.s32.totalorder %s204, %s220
    %p222 = scmp.eq.s32.totalorder %s19, 0
    %p223 = por %p221, %p222
    %p224 = scmp.le.s32.totalorder 1, %s13
    %p225 = scmp.lt.s32.totalorder %s13, 3
    %p226 = pnand %p224, %p225
    %p227 = pneg %p226
    // Predicated region
    $region9: #{triangle_net_forward.1} parent=5 // pred_check
      _
    $region10: #{triangle_net_forward.1} parent=5 // pred_check_branch
      %229 = sbr.rel (%p226) target = $region12
    $region11: #{triangle_net_forward.1} parent=5 // pred_region
      %s230 = ssub.s32 %s13, 1
      // Predicated region
      $region13: #{triangle_net_forward.1} parent=11 // pred_check
        %p231 = pneg %p83
      $region14: #{triangle_net_forward.1} parent=11 // pred_check_branch
        %233 = sbr.rel (%p231) target = $region16
      $region15: #{triangle_net_forward.1} parent=11 // pred_region
        _
      $region16: #{triangle_net_forward.1} parent=11 // pred_fallthru
        _
      // Predicated region
      $region17: #{triangle_net_forward.1} parent=11 // pred_check
        %p234 = pneg %p104
      $region18: #{triangle_net_forward.1} parent=11 // pred_check_branch
        %236 = sbr.rel (%p234) target = $region20
      $region19: #{triangle_net_forward.1} parent=11 // pred_region
        _
      $region20: #{triangle_net_forward.1} parent=11 // pred_fallthru
        _
      // Predicated region
      $region21: #{triangle_net_forward.1} parent=11 // pred_check
        %p237 = pneg %p125
      $region22: #{triangle_net_forward.1} parent=11 // pred_check_branch
        %239 = sbr.rel (%p237) target = $region24
      $region23: #{triangle_net_forward.1} parent=11 // pred_region
        _
      $region24: #{triangle_net_forward.1} parent=11 // pred_fallthru
        _
      // Predicated region
      $region25: #{triangle_net_forward.1} parent=11 // pred_check
        %p240 = pneg %p146
      $region26: #{triangle_net_forward.1} parent=11 // pred_check_branch
        %242 = sbr.rel (%p240) target = $region28
      $region27: #{triangle_net_forward.1} parent=11 // pred_region
        _
      $region28: #{triangle_net_forward.1} parent=11 // pred_fallthru
        _
      // Predicated region
      $region29: #{triangle_net_forward.1} parent=11 // pred_check
        %p243 = pneg %p167
      $region30: #{triangle_net_forward.1} parent=11 // pred_check_branch
        %245 = sbr.rel (%p243) target = $region32
      $region31: #{triangle_net_forward.1} parent=11 // pred_region
        _
      $region32: #{triangle_net_forward.1} parent=11 // pred_fallthru
        _
      // Predicated region
      $region33: #{triangle_net_forward.1} parent=11 // pred_check
        %p246 = pneg %p188
      $region34: #{triangle_net_forward.1} parent=11 // pred_check_branch
        %248 = sbr.rel (%p246) target = $region36
      $region35: #{triangle_net_forward.1} parent=11 // pred_region
        _
      $region36: #{triangle_net_forward.1} parent=11 // pred_fallthru
        _
    $region12: #{triangle_net_forward.1} parent=5 // pred_fallthru
      _
    %p249 = scmp.lt.s32.totalorder %s13, 2
    // Predicated region
    $region37: #{triangle_net_forward.1} parent=5 // pred_check
      %p250 = pneg %p249
    $region38: #{triangle_net_forward.1} parent=5 // pred_check_branch
      %252 = sbr.rel (%p250) target = $region40
    $region39: #{triangle_net_forward.1} parent=5 // pred_region
      // Predicated region
      $region41: #{triangle_net_forward.1} parent=39 // pred_check
        %p253 = pneg %p56
      $region42: #{triangle_net_forward.1} parent=39 // pred_check_branch
        %255 = sbr.rel (%p253) target = $region44
      $region43: #{triangle_net_forward.1} parent=39 // pred_region
        %s256 = sadd.s32 %s21, %s22
        %s257 = smul.u32 32, %s256
        %p258 = scmp.lt.s32.totalorder %s20, 1
        %s259 = scalar_select %p258, %s20, 1
        %p260 = scmp.lt.s32.totalorder %s257, 31
        %s261 = scalar_select %p260, %s257, 31
        %s262 = smul.addr %s259, 32
        %s263 = sadd.s32 %s261, %s262
        %s264 = smul.addr %s263, 8
        %s265 = scalar_lea.vmem %s0, %s264
        %s266 = sadd.s32 %s21, %s22
        %s267 = smul.u32 32, %s266
      $region44: #{triangle_net_forward.1} parent=39 // pred_fallthru
        _
    $region40: #{triangle_net_forward.1} parent=5 // pred_fallthru
      _
    %p268 = scmp.le.s32.totalorder 1, %s13
    %p269 = scmp.lt.s32.totalorder %s13, 3
    %p270 = pnand %p268, %p269
    %p271 = pneg %p270
    // Predicated region
    $region45: #{triangle_net_forward.1} parent=5 // pred_check
      _
    $region46: #{triangle_net_forward.1} parent=5 // pred_check_branch
      %273 = sbr.rel (%p270) target = $region48
    $region47: #{triangle_net_forward.1} parent=5 // pred_region
      %s274 = ssub.s32 %s13, 1
      %s275 = sadd.s32 %s24, %s25
      %s276 = smul.u32 32, %s275
      %p277 = scmp.lt.s32.totalorder %s23, 1
      %s278 = scalar_select %p277, %s23, 1
      %p279 = scmp.lt.s32.totalorder %s276, 31
      %s280 = scalar_select %p279, %s276, 31
      %s281 = smul.addr %s278, 32
      %s282 = sadd.s32 %s280, %s281
      %s283 = smul.addr %s282, 8
      %s284 = scalar_lea.vmem %s0, %s283
      %p285 = pneg %p62
      %p286 = pneg %p59
      %p287 = pneg %p83
      %p288 = pneg %p80
      %p289 = pneg %p104
      %p290 = pneg %p101
      %p291 = pneg %p125
      %p292 = pneg %p122
      %p293 = pneg %p146
      %p294 = pneg %p143
      %p295 = pneg %p167
      %p296 = pneg %p164
      %p297 = pneg %p188
      %p298 = pneg %p185
      %p299 = pneg %p216
      %p300 = pneg %p213
      %p301 = scmp.lt.s32.totalorder %s23, 1
      %s302 = scalar_select %p301, %s23, 1
      %p303 = scmp.lt.s32.totalorder %s24, 0
      %s304 = scalar_select %p303, %s24, 0
      %s305 = smul.addr %s304, 8
      %s306 = smul.addr %s302, 8
      %s307 = sadd.s32 %s305, %s306
      %s308 = scalar_lea.vmem %s7, %s307
      %s309 = sadd.s32 %s24, %s25
      %s310 = smul.u32 32, %s309
      %p311 = scmp.lt.s32.totalorder %s23, 1
      %s312 = scalar_select %p311, %s23, 1
      %p313 = scmp.lt.s32.totalorder %s310, 31
      %s314 = scalar_select %p313, %s310, 31
      %s315 = smul.addr %s312, 32
      %s316 = sadd.s32 %s314, %s315
      %s317 = smul.addr %s316, 8
      %s318 = scalar_lea.vmem %s0, %s317
      %s319 = sadd.s32 %s24, %s25
      %s320 = smul.u32 32, %s319
      %p321 = scmp.lt.s32.totalorder %s23, 1
      %s322 = scalar_select %p321, %s23, 1
      %p323 = scmp.lt.s32.totalorder %s24, 0
      %s324 = scalar_select %p323, %s24, 0
      %s325 = smul.addr %s324, 8
      %s326 = smul.addr %s322, 8
      %s327 = sadd.s32 %s325, %s326
      %s328 = scalar_lea.vmem %s7, %s327
      %p330 = scmp.eq.s32.totalorder %s25, 0
      // Predicated region
      $region49: #{triangle_net_forward.1} parent=47 // pred_check
        %p331 = pneg %p330
      $region50: #{triangle_net_forward.1} parent=47 // pred_check_branch
        %333 = sbr.rel (%p331) target = $region52
      $region51: #{triangle_net_forward.1} parent=47 // pred_region
        %334 = vst [vmem:[#allocation2] sm:$0xff] -inf
        %335 = vst [vmem:[#allocation2 + $0x8] sm:$0xff] -inf
        %336 = vst [vmem:[#allocation2 + $0x10] sm:$0xff] -inf
        %337 = vst [vmem:[#allocation2 + $0x18] sm:$0xff] -inf
        %338 = vst [vmem:[#allocation2 + $0x20] sm:$0xff] -inf
        %339 = vst [vmem:[#allocation2 + $0x28] sm:$0xff] -inf
        %340 = vst [vmem:[#allocation2 + $0x30] sm:$0xff] -inf
        %341 = vst [vmem:[#allocation2 + $0x38] sm:$0xff] -inf
      $region52: #{triangle_net_forward.1} parent=47 // pred_fallthru
        _
      %v342 = vld [vmem:[%s318] sm:$0xff]
      %v343 = vld [vmem:[%s318 + $0x8] sm:$0xff]
      %v344 = vld [vmem:[%s318 + $0x10] sm:$0xff]
      %v345 = vld [vmem:[%s318 + $0x18] sm:$0xff]
      %v346 = vld [vmem:[%s318 + $0x20] sm:$0xff]
      %v347 = vld [vmem:[%s318 + $0x28] sm:$0xff]
      %v348 = vld [vmem:[%s318 + $0x30] sm:$0xff]
      %v349 = vld [vmem:[%s318 + $0x38] sm:$0xff]
      %v350 = vld [vmem:[%s318 + $0x40] sm:$0xff]
      %v351 = vld [vmem:[%s318 + $0x48] sm:$0xff]
      %v352 = vld [vmem:[%s318 + $0x50] sm:$0xff]
      %v353 = vld [vmem:[%s318 + $0x58] sm:$0xff]
      %v354 = vld [vmem:[%s318 + $0x60] sm:$0xff]
      %v355 = vld [vmem:[%s318 + $0x68] sm:$0xff]
      %v356 = vld [vmem:[%s318 + $0x70] sm:$0xff]
      %v357 = vld [vmem:[%s318 + $0x78] sm:$0xff]
      %v358 = vld [vmem:[%s318 + $0x80] sm:$0xff]
      %v359 = vld [vmem:[%s318 + $0x88] sm:$0xff]
      %v360 = vld [vmem:[%s318 + $0x90] sm:$0xff]
      %v361 = vld [vmem:[%s318 + $0x98] sm:$0xff]
      %v362 = vld [vmem:[%s318 + $0xa0] sm:$0xff]
      %v363 = vld [vmem:[%s318 + $0xa8] sm:$0xff]
      %v364 = vld [vmem:[%s318 + $0xb0] sm:$0xff]
      %v365 = vld [vmem:[%s318 + $0xb8] sm:$0xff]
      %v366 = vld [vmem:[%s318 + $0xc0] sm:$0xff]
      %v367 = vld [vmem:[%s318 + $0xc8] sm:$0xff]
      %v368 = vld [vmem:[%s318 + $0xd0] sm:$0xff]
      %v369 = vld [vmem:[%s318 + $0xd8] sm:$0xff]
      %v370 = vld [vmem:[%s318 + $0xe0] sm:$0xff]
      %v371 = vld [vmem:[%s318 + $0xe8] sm:$0xff]
      %v372 = vld [vmem:[%s318 + $0xf0] sm:$0xff]
      %v373 = vld [vmem:[%s318 + $0xf8] sm:$0xff]
      %v374 = vld [vmem:[%s2] sm:$0x1]
      %v375 = vld [vmem:[%s1] sm:$0x1]
      %377 = vset.pattern.permute.xlu0 0
      %378 = vperm.xlu0 %377, %v342
      %v379 = vpop.permute.xlu0 %378
      %382 = vset.pattern.permute.xlu0 0
      %383 = vperm.xlu0 %382, %v343
      %v384 = vpop.permute.xlu0 %383
      %387 = vset.pattern.permute.xlu0 0
      %388 = vperm.xlu0 %387, %v344
      %v389 = vpop.permute.xlu0 %388
      %392 = vset.pattern.permute.xlu0 0
      %393 = vperm.xlu0 %392, %v345
      %v394 = vpop.permute.xlu0 %393
      %397 = vset.pattern.permute.xlu0 0
      %398 = vperm.xlu0 %397, %v346
      %v399 = vpop.permute.xlu0 %398
      %402 = vset.pattern.permute.xlu0 0
      %403 = vperm.xlu0 %402, %v347
      %v404 = vpop.permute.xlu0 %403
      %407 = vset.pattern.permute.xlu0 0
      %408 = vperm.xlu0 %407, %v348
      %v409 = vpop.permute.xlu0 %408
      %412 = vset.pattern.permute.xlu0 0
      %413 = vperm.xlu0 %412, %v349
      %v414 = vpop.permute.xlu0 %413
      %417 = vset.pattern.permute.xlu0 0
      %418 = vperm.xlu0 %417, %v350
      %v419 = vpop.permute.xlu0 %418
      %422 = vset.pattern.permute.xlu0 0
      %423 = vperm.xlu0 %422, %v351
      %v424 = vpop.permute.xlu0 %423
      %427 = vset.pattern.permute.xlu0 0
      %428 = vperm.xlu0 %427, %v352
      %v429 = vpop.permute.xlu0 %428
      %432 = vset.pattern.permute.xlu0 0
      %433 = vperm.xlu0 %432, %v353
      %v434 = vpop.permute.xlu0 %433
      %437 = vset.pattern.permute.xlu0 0
      %438 = vperm.xlu0 %437, %v354
      %v439 = vpop.permute.xlu0 %438
      %442 = vset.pattern.permute.xlu0 0
      %443 = vperm.xlu0 %442, %v355
      %v444 = vpop.permute.xlu0 %443
      %447 = vset.pattern.permute.xlu0 0
      %448 = vperm.xlu0 %447, %v356
      %v449 = vpop.permute.xlu0 %448
      %452 = vset.pattern.permute.xlu0 0
      %453 = vperm.xlu0 %452, %v357
      %v454 = vpop.permute.xlu0 %453
      %457 = vset.pattern.permute.xlu0 0
      %458 = vperm.xlu0 %457, %v358
      %v459 = vpop.permute.xlu0 %458
      %462 = vset.pattern.permute.xlu0 0
      %463 = vperm.xlu0 %462, %v359
      %v464 = vpop.permute.xlu0 %463
      %467 = vset.pattern.permute.xlu0 0
      %468 = vperm.xlu0 %467, %v360
      %v469 = vpop.permute.xlu0 %468
      %472 = vset.pattern.permute.xlu0 0
      %473 = vperm.xlu0 %472, %v361
      %v474 = vpop.permute.xlu0 %473
      %477 = vset.pattern.permute.xlu0 0
      %478 = vperm.xlu0 %477, %v362
      %v479 = vpop.permute.xlu0 %478
      %482 = vset.pattern.permute.xlu0 0
      %483 = vperm.xlu0 %482, %v363
      %v484 = vpop.permute.xlu0 %483
      %487 = vset.pattern.permute.xlu0 0
      %488 = vperm.xlu0 %487, %v364
      %v489 = vpop.permute.xlu0 %488
      %492 = vset.pattern.permute.xlu0 0
      %493 = vperm.xlu0 %492, %v365
      %v494 = vpop.permute.xlu0 %493
      %497 = vset.pattern.permute.xlu0 0
      %498 = vperm.xlu0 %497, %v366
      %v499 = vpop.permute.xlu0 %498
      %502 = vset.pattern.permute.xlu0 0
      %503 = vperm.xlu0 %502, %v367
      %v504 = vpop.permute.xlu0 %503
      %507 = vset.pattern.permute.xlu0 0
      %508 = vperm.xlu0 %507, %v368
      %v509 = vpop.permute.xlu0 %508
      %512 = vset.pattern.permute.xlu0 0
      %513 = vperm.xlu0 %512, %v369
      %v514 = vpop.permute.xlu0 %513
      %517 = vset.pattern.permute.xlu0 0
      %518 = vperm.xlu0 %517, %v370
      %v519 = vpop.permute.xlu0 %518
      %522 = vset.pattern.permute.xlu0 0
      %523 = vperm.xlu0 %522, %v371
      %v524 = vpop.permute.xlu0 %523
      %527 = vset.pattern.permute.xlu0 0
      %528 = vperm.xlu0 %527, %v372
      %v529 = vpop.permute.xlu0 %528
      %532 = vset.pattern.permute.xlu0 0
      %533 = vperm.xlu0 %532, %v373
      %v534 = vpop.permute.xlu0 %533
      %v536 = vlaneseq
      %v537 = vshrl.u32 %v536, 7
      %v538 = vsub.s32 0, %v537
      %v539 = vrot.slane %v375, %v538
      %v540 = vmul.f32 %v379, %v539
      %v541 = vmul.f32 %v384, %v539
      %v542 = vmul.f32 %v389, %v539
      %v543 = vmul.f32 %v394, %v539
      %v544 = vmul.f32 %v399, %v539
      %v545 = vmul.f32 %v404, %v539
      %v546 = vmul.f32 %v409, %v539
      %v547 = vmul.f32 %v414, %v539
      %v548 = vmul.f32 %v419, %v539
      %v549 = vmul.f32 %v424, %v539
      %v550 = vmul.f32 %v429, %v539
      %v551 = vmul.f32 %v434, %v539
      %v552 = vmul.f32 %v439, %v539
      %v553 = vmul.f32 %v444, %v539
      %v554 = vmul.f32 %v449, %v539
      %v555 = vmul.f32 %v454, %v539
      %v556 = vmul.f32 %v459, %v539
      %v557 = vmul.f32 %v464, %v539
      %v558 = vmul.f32 %v469, %v539
      %v559 = vmul.f32 %v474, %v539
      %v560 = vmul.f32 %v479, %v539
      %v561 = vmul.f32 %v484, %v539
      %v562 = vmul.f32 %v489, %v539
      %v563 = vmul.f32 %v494, %v539
      %v564 = vmul.f32 %v499, %v539
      %v565 = vmul.f32 %v504, %v539
      %v566 = vmul.f32 %v509, %v539
      %v567 = vmul.f32 %v514, %v539
      %v568 = vmul.f32 %v519, %v539
      %v569 = vmul.f32 %v524, %v539
      %v570 = vmul.f32 %v529, %v539
      %v571 = vmul.f32 %v534, %v539
      %v573 = vlaneseq
      %v574 = vshrl.u32 %v573, 7
      %v575 = vsub.s32 0, %v574
      %v576 = vrot.slane %v374, %v575
      %v578 = vadd.f32 %v576, %v540
      %v579 = vadd.f32 %v576, %v541
      %v580 = vadd.f32 %v576, %v542
      %v581 = vadd.f32 %v576, %v543
      %v582 = vadd.f32 %v576, %v544
      %v583 = vadd.f32 %v576, %v545
      %v584 = vadd.f32 %v576, %v546
      %v585 = vadd.f32 %v576, %v547
      %v586 = vadd.f32 %v576, %v548
      %v587 = vadd.f32 %v576, %v549
      %v588 = vadd.f32 %v576, %v550
      %v589 = vadd.f32 %v576, %v551
      %v590 = vadd.f32 %v576, %v552
      %v591 = vadd.f32 %v576, %v553
      %v592 = vadd.f32 %v576, %v554
      %v593 = vadd.f32 %v576, %v555
      %v594 = vadd.f32 %v576, %v556
      %v595 = vadd.f32 %v576, %v557
      %v596 = vadd.f32 %v576, %v558
      %v597 = vadd.f32 %v576, %v559
      %v598 = vadd.f32 %v576, %v560
      %v599 = vadd.f32 %v576, %v561
      %v600 = vadd.f32 %v576, %v562
      %v601 = vadd.f32 %v576, %v563
      %v602 = vadd.f32 %v576, %v564
      %v603 = vadd.f32 %v576, %v565
      %v604 = vadd.f32 %v576, %v566
      %v605 = vadd.f32 %v576, %v567
      %v606 = vadd.f32 %v576, %v568
      %v607 = vadd.f32 %v576, %v569
      %v608 = vadd.f32 %v576, %v570
      %v609 = vadd.f32 %v576, %v571
      %v610 = vld [vmem:[%s1 + $0x1] sm:$0x1]
      %611 = vset.pattern.permute.xlu0 1
      %612 = vperm.xlu0 %611, %v342
      %v613 = vpop.permute.xlu0 %612
      %615 = vset.pattern.permute.xlu0 1
      %616 = vperm.xlu0 %615, %v343
      %v617 = vpop.permute.xlu0 %616
      %619 = vset.pattern.permute.xlu0 1
      %620 = vperm.xlu0 %619, %v344
      %v621 = vpop.permute.xlu0 %620
      %623 = vset.pattern.permute.xlu0 1
      %624 = vperm.xlu0 %623, %v345
      %v625 = vpop.permute.xlu0 %624
      %627 = vset.pattern.permute.xlu0 1
      %628 = vperm.xlu0 %627, %v346
      %v629 = vpop.permute.xlu0 %628
      %631 = vset.pattern.permute.xlu0 1
      %632 = vperm.xlu0 %631, %v347
      %v633 = vpop.permute.xlu0 %632
      %635 = vset.pattern.permute.xlu0 1
      %636 = vperm.xlu0 %635, %v348
      %v637 = vpop.permute.xlu0 %636
      %639 = vset.pattern.permute.xlu0 1
      %640 = vperm.xlu0 %639, %v349
      %v641 = vpop.permute.xlu0 %640
      %643 = vset.pattern.permute.xlu0 1
      %644 = vperm.xlu0 %643, %v350
      %v645 = vpop.permute.xlu0 %644
      %647 = vset.pattern.permute.xlu0 1
      %648 = vperm.xlu0 %647, %v351
      %v649 = vpop.permute.xlu0 %648
      %651 = vset.pattern.permute.xlu0 1
      %652 = vperm.xlu0 %651, %v352
      %v653 = vpop.permute.xlu0 %652
      %655 = vset.pattern.permute.xlu0 1
      %656 = vperm.xlu0 %655, %v353
      %v657 = vpop.permute.xlu0 %656
      %659 = vset.pattern.permute.xlu0 1
      %660 = vperm.xlu0 %659, %v354
      %v661 = vpop.permute.xlu0 %660
      %663 = vset.pattern.permute.xlu0 1
      %664 = vperm.xlu0 %663, %v355
      %v665 = vpop.permute.xlu0 %664
      %667 = vset.pattern.permute.xlu0 1
      %668 = vperm.xlu0 %667, %v356
      %v669 = vpop.permute.xlu0 %668
      %671 = vset.pattern.permute.xlu0 1
      %672 = vperm.xlu0 %671, %v357
      %v673 = vpop.permute.xlu0 %672
      %675 = vset.pattern.permute.xlu0 1
      %676 = vperm.xlu0 %675, %v358
      %v677 = vpop.permute.xlu0 %676
      %679 = vset.pattern.permute.xlu0 1
      %680 = vperm.xlu0 %679, %v359
      %v681 = vpop.permute.xlu0 %680
      %683 = vset.pattern.permute.xlu0 1
      %684 = vperm.xlu0 %683, %v360
      %v685 = vpop.permute.xlu0 %684
      %687 = vset.pattern.permute.xlu0 1
      %688 = vperm.xlu0 %687, %v361
      %v689 = vpop.permute.xlu0 %688
      %691 = vset.pattern.permute.xlu0 1
      %692 = vperm.xlu0 %691, %v362
      %v693 = vpop.permute.xlu0 %692
      %695 = vset.pattern.permute.xlu0 1
      %696 = vperm.xlu0 %695, %v363
      %v697 = vpop.permute.xlu0 %696
      %699 = vset.pattern.permute.xlu0 1
      %700 = vperm.xlu0 %699, %v364
      %v701 = vpop.permute.xlu0 %700
      %703 = vset.pattern.permute.xlu0 1
      %704 = vperm.xlu0 %703, %v365
      %v705 = vpop.permute.xlu0 %704
      %707 = vset.pattern.permute.xlu0 1
      %708 = vperm.xlu0 %707, %v366
      %v709 = vpop.permute.xlu0 %708
      %711 = vset.pattern.permute.xlu0 1
      %712 = vperm.xlu0 %711, %v367
      %v713 = vpop.permute.xlu0 %712
      %715 = vset.pattern.permute.xlu0 1
      %716 = vperm.xlu0 %715, %v368
      %v717 = vpop.permute.xlu0 %716
      %719 = vset.pattern.permute.xlu0 1
      %720 = vperm.xlu0 %719, %v369
      %v721 = vpop.permute.xlu0 %720
      %723 = vset.pattern.permute.xlu0 1
      %724 = vperm.xlu0 %723, %v370
      %v725 = vpop.permute.xlu0 %724
      %727 = vset.pattern.permute.xlu0 1
      %728 = vperm.xlu0 %727, %v371
      %v729 = vpop.permute.xlu0 %728
      %731 = vset.pattern.permute.xlu0 1
      %732 = vperm.xlu0 %731, %v372
      %v733 = vpop.permute.xlu0 %732
      %735 = vset.pattern.permute.xlu0 1
      %736 = vperm.xlu0 %735, %v373
      %v737 = vpop.permute.xlu0 %736
      %v739 = vlaneseq
      %v740 = vshrl.u32 %v739, 7
      %v741 = vsub.s32 0, %v740
      %v742 = vrot.slane %v610, %v741
      %v743 = vmul.f32 %v613, %v742
      %v744 = vmul.f32 %v617, %v742
      %v745 = vmul.f32 %v621, %v742
      %v746 = vmul.f32 %v625, %v742
      %v747 = vmul.f32 %v629, %v742
      %v748 = vmul.f32 %v633, %v742
      %v749 = vmul.f32 %v637, %v742
      %v750 = vmul.f32 %v641, %v742
      %v751 = vmul.f32 %v645, %v742
      %v752 = vmul.f32 %v649, %v742
      %v753 = vmul.f32 %v653, %v742
      %v754 = vmul.f32 %v657, %v742
      %v755 = vmul.f32 %v661, %v742
      %v756 = vmul.f32 %v665, %v742
      %v757 = vmul.f32 %v669, %v742
      %v758 = vmul.f32 %v673, %v742
      %v759 = vmul.f32 %v677, %v742
      %v760 = vmul.f32 %v681, %v742
      %v761 = vmul.f32 %v685, %v742
      %v762 = vmul.f32 %v689, %v742
      %v763 = vmul.f32 %v693, %v742
      %v764 = vmul.f32 %v697, %v742
      %v765 = vmul.f32 %v701, %v742
      %v766 = vmul.f32 %v705, %v742
      %v767 = vmul.f32 %v709, %v742
      %v768 = vmul.f32 %v713, %v742
      %v769 = vmul.f32 %v717, %v742
      %v770 = vmul.f32 %v721, %v742
      %v771 = vmul.f32 %v725, %v742
      %v772 = vmul.f32 %v729, %v742
      %v773 = vmul.f32 %v733, %v742
      %v774 = vmul.f32 %v737, %v742
      %v775 = vadd.f32 %v578, %v743
      %v776 = vadd.f32 %v579, %v744
      %v777 = vadd.f32 %v580, %v745
      %v778 = vadd.f32 %v581, %v746
      %v779 = vadd.f32 %v582, %v747
      %v780 = vadd.f32 %v583, %v748
      %v781 = vadd.f32 %v584, %v749
      %v782 = vadd.f32 %v585, %v750
      %v783 = vadd.f32 %v586, %v751
      %v784 = vadd.f32 %v587, %v752
      %v785 = vadd.f32 %v588, %v753
      %v786 = vadd.f32 %v589, %v754
      %v787 = vadd.f32 %v590, %v755
      %v788 = vadd.f32 %v591, %v756
      %v789 = vadd.f32 %v592, %v757
      %v790 = vadd.f32 %v593, %v758
      %v791 = vadd.f32 %v594, %v759
      %v792 = vadd.f32 %v595, %v760
      %v793 = vadd.f32 %v596, %v761
      %v794 = vadd.f32 %v597, %v762
      %v795 = vadd.f32 %v598, %v763
      %v796 = vadd.f32 %v599, %v764
      %v797 = vadd.f32 %v600, %v765
      %v798 = vadd.f32 %v601, %v766
      %v799 = vadd.f32 %v602, %v767
      %v800 = vadd.f32 %v603, %v768
      %v801 = vadd.f32 %v604, %v769
      %v802 = vadd.f32 %v605, %v770
      %v803 = vadd.f32 %v606, %v771
      %v804 = vadd.f32 %v607, %v772
      %v805 = vadd.f32 %v608, %v773
      %v806 = vadd.f32 %v609, %v774
      %v807 = vld [vmem:[%s1 + $0x2] sm:$0x1]
      %808 = vset.pattern.permute.xlu0 2
      %809 = vperm.xlu0 %808, %v342
      %v810 = vpop.permute.xlu0 %809
      %812 = vset.pattern.permute.xlu0 2
      %813 = vperm.xlu0 %812, %v343
      %v814 = vpop.permute.xlu0 %813
      %816 = vset.pattern.permute.xlu0 2
      %817 = vperm.xlu0 %816, %v344
      %v818 = vpop.permute.xlu0 %817
      %820 = vset.pattern.permute.xlu0 2
      %821 = vperm.xlu0 %820, %v345
      %v822 = vpop.permute.xlu0 %821
      %824 = vset.pattern.permute.xlu0 2
      %825 = vperm.xlu0 %824, %v346
      %v826 = vpop.permute.xlu0 %825
      %828 = vset.pattern.permute.xlu0 2
      %829 = vperm.xlu0 %828, %v347
      %v830 = vpop.permute.xlu0 %829
      %832 = vset.pattern.permute.xlu0 2
      %833 = vperm.xlu0 %832, %v348
      %v834 = vpop.permute.xlu0 %833
      %836 = vset.pattern.permute.xlu0 2
      %837 = vperm.xlu0 %836, %v349
      %v838 = vpop.permute.xlu0 %837
      %840 = vset.pattern.permute.xlu0 2
      %841 = vperm.xlu0 %840, %v350
      %v842 = vpop.permute.xlu0 %841
      %844 = vset.pattern.permute.xlu0 2
      %845 = vperm.xlu0 %844, %v351
      %v846 = vpop.permute.xlu0 %845
      %848 = vset.pattern.permute.xlu0 2
      %849 = vperm.xlu0 %848, %v352
      %v850 = vpop.permute.xlu0 %849
      %852 = vset.pattern.permute.xlu0 2
      %853 = vperm.xlu0 %852, %v353
      %v854 = vpop.permute.xlu0 %853
      %856 = vset.pattern.permute.xlu0 2
      %857 = vperm.xlu0 %856, %v354
      %v858 = vpop.permute.xlu0 %857
      %860 = vset.pattern.permute.xlu0 2
      %861 = vperm.xlu0 %860, %v355
      %v862 = vpop.permute.xlu0 %861
      %864 = vset.pattern.permute.xlu0 2
      %865 = vperm.xlu0 %864, %v356
      %v866 = vpop.permute.xlu0 %865
      %868 = vset.pattern.permute.xlu0 2
      %869 = vperm.xlu0 %868, %v357
      %v870 = vpop.permute.xlu0 %869
      %872 = vset.pattern.permute.xlu0 2
      %873 = vperm.xlu0 %872, %v358
      %v874 = vpop.permute.xlu0 %873
      %876 = vset.pattern.permute.xlu0 2
      %877 = vperm.xlu0 %876, %v359
      %v878 = vpop.permute.xlu0 %877
      %880 = vset.pattern.permute.xlu0 2
      %881 = vperm.xlu0 %880, %v360
      %v882 = vpop.permute.xlu0 %881
      %884 = vset.pattern.permute.xlu0 2
      %885 = vperm.xlu0 %884, %v361
      %v886 = vpop.permute.xlu0 %885
      %888 = vset.pattern.permute.xlu0 2
      %889 = vperm.xlu0 %888, %v362
      %v890 = vpop.permute.xlu0 %889
      %892 = vset.pattern.permute.xlu0 2
      %893 = vperm.xlu0 %892, %v363
      %v894 = vpop.permute.xlu0 %893
      %896 = vset.pattern.permute.xlu0 2
      %897 = vperm.xlu0 %896, %v364
      %v898 = vpop.permute.xlu0 %897
      %900 = vset.pattern.permute.xlu0 2
      %901 = vperm.xlu0 %900, %v365
      %v902 = vpop.permute.xlu0 %901
      %904 = vset.pattern.permute.xlu0 2
      %905 = vperm.xlu0 %904, %v366
      %v906 = vpop.permute.xlu0 %905
      %908 = vset.pattern.permute.xlu0 2
      %909 = vperm.xlu0 %908, %v367
      %v910 = vpop.permute.xlu0 %909
      %912 = vset.pattern.permute.xlu0 2
      %913 = vperm.xlu0 %912, %v368
      %v914 = vpop.permute.xlu0 %913
      %916 = vset.pattern.permute.xlu0 2
      %917 = vperm.xlu0 %916, %v369
      %v918 = vpop.permute.xlu0 %917
      %920 = vset.pattern.permute.xlu0 2
      %921 = vperm.xlu0 %920, %v370
      %v922 = vpop.permute.xlu0 %921
      %924 = vset.pattern.permute.xlu0 2
      %925 = vperm.xlu0 %924, %v371
      %v926 = vpop.permute.xlu0 %925
      %928 = vset.pattern.permute.xlu0 2
      %929 = vperm.xlu0 %928, %v372
      %v930 = vpop.permute.xlu0 %929
      %932 = vset.pattern.permute.xlu0 2
      %933 = vperm.xlu0 %932, %v373
      %v934 = vpop.permute.xlu0 %933
      %v936 = vlaneseq
      %v937 = vshrl.u32 %v936, 7
      %v938 = vsub.s32 0, %v937
      %v939 = vrot.slane %v807, %v938
      %v940 = vmul.f32 %v810, %v939
      %v941 = vmul.f32 %v814, %v939
      %v942 = vmul.f32 %v818, %v939
      %v943 = vmul.f32 %v822, %v939
      %v944 = vmul.f32 %v826, %v939
      %v945 = vmul.f32 %v830, %v939
      %v946 = vmul.f32 %v834, %v939
      %v947 = vmul.f32 %v838, %v939
      %v948 = vmul.f32 %v842, %v939
      %v949 = vmul.f32 %v846, %v939
      %v950 = vmul.f32 %v850, %v939
      %v951 = vmul.f32 %v854, %v939
      %v952 = vmul.f32 %v858, %v939
      %v953 = vmul.f32 %v862, %v939
      %v954 = vmul.f32 %v866, %v939
      %v955 = vmul.f32 %v870, %v939
      %v956 = vmul.f32 %v874, %v939
      %v957 = vmul.f32 %v878, %v939
      %v958 = vmul.f32 %v882, %v939
      %v959 = vmul.f32 %v886, %v939
      %v960 = vmul.f32 %v890, %v939
      %v961 = vmul.f32 %v894, %v939
      %v962 = vmul.f32 %v898, %v939
      %v963 = vmul.f32 %v902, %v939
      %v964 = vmul.f32 %v906, %v939
      %v965 = vmul.f32 %v910, %v939
      %v966 = vmul.f32 %v914, %v939
      %v967 = vmul.f32 %v918, %v939
      %v968 = vmul.f32 %v922, %v939
      %v969 = vmul.f32 %v926, %v939
      %v970 = vmul.f32 %v930, %v939
      %v971 = vmul.f32 %v934, %v939
      %v972 = vadd.f32 %v775, %v940
      %v973 = vadd.f32 %v776, %v941
      %v974 = vadd.f32 %v777, %v942
      %v975 = vadd.f32 %v778, %v943
      %v976 = vadd.f32 %v779, %v944
      %v977 = vadd.f32 %v780, %v945
      %v978 = vadd.f32 %v781, %v946
      %v979 = vadd.f32 %v782, %v947
      %v980 = vadd.f32 %v783, %v948
      %v981 = vadd.f32 %v784, %v949
      %v982 = vadd.f32 %v785, %v950
      %v983 = vadd.f32 %v786, %v951
      %v984 = vadd.f32 %v787, %v952
      %v985 = vadd.f32 %v788, %v953
      %v986 = vadd.f32 %v789, %v954
      %v987 = vadd.f32 %v790, %v955
      %v988 = vadd.f32 %v791, %v956
      %v989 = vadd.f32 %v792, %v957
      %v990 = vadd.f32 %v793, %v958
      %v991 = vadd.f32 %v794, %v959
      %v992 = vadd.f32 %v795, %v960
      %v993 = vadd.f32 %v796, %v961
      %v994 = vadd.f32 %v797, %v962
      %v995 = vadd.f32 %v798, %v963
      %v996 = vadd.f32 %v799, %v964
      %v997 = vadd.f32 %v800, %v965
      %v998 = vadd.f32 %v801, %v966
      %v999 = vadd.f32 %v802, %v967
      %v1000 = vadd.f32 %v803, %v968
      %v1001 = vadd.f32 %v804, %v969
      %v1002 = vadd.f32 %v805, %v970
      %v1003 = vadd.f32 %v806, %v971
      %v1004 = vld [vmem:[%s1 + $0x3] sm:$0x1]
      %1005 = vset.pattern.permute.xlu0 3
      %1006 = vperm.xlu0 %1005, %v342
      %v1007 = vpop.permute.xlu0 %1006
      %1009 = vset.pattern.permute.xlu0 3
      %1010 = vperm.xlu0 %1009, %v343
      %v1011 = vpop.permute.xlu0 %1010
      %1013 = vset.pattern.permute.xlu0 3
      %1014 = vperm.xlu0 %1013, %v344
      %v1015 = vpop.permute.xlu0 %1014
      %1017 = vset.pattern.permute.xlu0 3
      %1018 = vperm.xlu0 %1017, %v345
      %v1019 = vpop.permute.xlu0 %1018
      %1021 = vset.pattern.permute.xlu0 3
      %1022 = vperm.xlu0 %1021, %v346
      %v1023 = vpop.permute.xlu0 %1022
      %1025 = vset.pattern.permute.xlu0 3
      %1026 = vperm.xlu0 %1025, %v347
      %v1027 = vpop.permute.xlu0 %1026
      %1029 = vset.pattern.permute.xlu0 3
      %1030 = vperm.xlu0 %1029, %v348
      %v1031 = vpop.permute.xlu0 %1030
      %1033 = vset.pattern.permute.xlu0 3
      %1034 = vperm.xlu0 %1033, %v349
      %v1035 = vpop.permute.xlu0 %1034
      %1037 = vset.pattern.permute.xlu0 3
      %1038 = vperm.xlu0 %1037, %v350
      %v1039 = vpop.permute.xlu0 %1038
      %1041 = vset.pattern.permute.xlu0 3
      %1042 = vperm.xlu0 %1041, %v351
      %v1043 = vpop.permute.xlu0 %1042
      %1045 = vset.pattern.permute.xlu0 3
      %1046 = vperm.xlu0 %1045, %v352
      %v1047 = vpop.permute.xlu0 %1046
      %1049 = vset.pattern.permute.xlu0 3
      %1050 = vperm.xlu0 %1049, %v353
      %v1051 = vpop.permute.xlu0 %1050
      %1053 = vset.pattern.permute.xlu0 3
      %1054 = vperm.xlu0 %1053, %v354
      %v1055 = vpop.permute.xlu0 %1054
      %1057 = vset.pattern.permute.xlu0 3
      %1058 = vperm.xlu0 %1057, %v355
      %v1059 = vpop.permute.xlu0 %1058
      %1061 = vset.pattern.permute.xlu0 3
      %1062 = vperm.xlu0 %1061, %v356
      %v1063 = vpop.permute.xlu0 %1062
      %1065 = vset.pattern.permute.xlu0 3
      %1066 = vperm.xlu0 %1065, %v357
      %v1067 = vpop.permute.xlu0 %1066
      %1069 = vset.pattern.permute.xlu0 3
      %1070 = vperm.xlu0 %1069, %v358
      %v1071 = vpop.permute.xlu0 %1070
      %1073 = vset.pattern.permute.xlu0 3
      %1074 = vperm.xlu0 %1073, %v359
      %v1075 = vpop.permute.xlu0 %1074
      %1077 = vset.pattern.permute.xlu0 3
      %1078 = vperm.xlu0 %1077, %v360
      %v1079 = vpop.permute.xlu0 %1078
      %1081 = vset.pattern.permute.xlu0 3
      %1082 = vperm.xlu0 %1081, %v361
      %v1083 = vpop.permute.xlu0 %1082
      %1085 = vset.pattern.permute.xlu0 3
      %1086 = vperm.xlu0 %1085, %v362
      %v1087 = vpop.permute.xlu0 %1086
      %1089 = vset.pattern.permute.xlu0 3
      %1090 = vperm.xlu0 %1089, %v363
      %v1091 = vpop.permute.xlu0 %1090
      %1093 = vset.pattern.permute.xlu0 3
      %1094 = vperm.xlu0 %1093, %v364
      %v1095 = vpop.permute.xlu0 %1094
      %1097 = vset.pattern.permute.xlu0 3
      %1098 = vperm.xlu0 %1097, %v365
      %v1099 = vpop.permute.xlu0 %1098
      %1101 = vset.pattern.permute.xlu0 3
      %1102 = vperm.xlu0 %1101, %v366
      %v1103 = vpop.permute.xlu0 %1102
      %1105 = vset.pattern.permute.xlu0 3
      %1106 = vperm.xlu0 %1105, %v367
      %v1107 = vpop.permute.xlu0 %1106
      %1109 = vset.pattern.permute.xlu0 3
      %1110 = vperm.xlu0 %1109, %v368
      %v1111 = vpop.permute.xlu0 %1110
      %1113 = vset.pattern.permute.xlu0 3
      %1114 = vperm.xlu0 %1113, %v369
      %v1115 = vpop.permute.xlu0 %1114
      %1117 = vset.pattern.permute.xlu0 3
      %1118 = vperm.xlu0 %1117, %v370
      %v1119 = vpop.permute.xlu0 %1118
      %1121 = vset.pattern.permute.xlu0 3
      %1122 = vperm.xlu0 %1121, %v371
      %v1123 = vpop.permute.xlu0 %1122
      %1125 = vset.pattern.permute.xlu0 3
      %1126 = vperm.xlu0 %1125, %v372
      %v1127 = vpop.permute.xlu0 %1126
      %1129 = vset.pattern.permute.xlu0 3
      %1130 = vperm.xlu0 %1129, %v373
      %v1131 = vpop.permute.xlu0 %1130
      %v1133 = vlaneseq
      %v1134 = vshrl.u32 %v1133, 7
      %v1135 = vsub.s32 0, %v1134
      %v1136 = vrot.slane %v1004, %v1135
      %v1137 = vmul.f32 %v1007, %v1136
      %v1138 = vmul.f32 %v1011, %v1136
      %v1139 = vmul.f32 %v1015, %v1136
      %v1140 = vmul.f32 %v1019, %v1136
      %v1141 = vmul.f32 %v1023, %v1136
      %v1142 = vmul.f32 %v1027, %v1136
      %v1143 = vmul.f32 %v1031, %v1136
      %v1144 = vmul.f32 %v1035, %v1136
      %v1145 = vmul.f32 %v1039, %v1136
      %v1146 = vmul.f32 %v1043, %v1136
      %v1147 = vmul.f32 %v1047, %v1136
      %v1148 = vmul.f32 %v1051, %v1136
      %v1149 = vmul.f32 %v1055, %v1136
      %v1150 = vmul.f32 %v1059, %v1136
      %v1151 = vmul.f32 %v1063, %v1136
      %v1152 = vmul.f32 %v1067, %v1136
      %v1153 = vmul.f32 %v1071, %v1136
      %v1154 = vmul.f32 %v1075, %v1136
      %v1155 = vmul.f32 %v1079, %v1136
      %v1156 = vmul.f32 %v1083, %v1136
      %v1157 = vmul.f32 %v1087, %v1136
      %v1158 = vmul.f32 %v1091, %v1136
      %v1159 = vmul.f32 %v1095, %v1136
      %v1160 = vmul.f32 %v1099, %v1136
      %v1161 = vmul.f32 %v1103, %v1136
      %v1162 = vmul.f32 %v1107, %v1136
      %v1163 = vmul.f32 %v1111, %v1136
      %v1164 = vmul.f32 %v1115, %v1136
      %v1165 = vmul.f32 %v1119, %v1136
      %v1166 = vmul.f32 %v1123, %v1136
      %v1167 = vmul.f32 %v1127, %v1136
      %v1168 = vmul.f32 %v1131, %v1136
      %v1169 = vadd.f32 %v972, %v1137
      %v1170 = vadd.f32 %v973, %v1138
      %v1171 = vadd.f32 %v974, %v1139
      %v1172 = vadd.f32 %v975, %v1140
      %v1173 = vadd.f32 %v976, %v1141
      %v1174 = vadd.f32 %v977, %v1142
      %v1175 = vadd.f32 %v978, %v1143
      %v1176 = vadd.f32 %v979, %v1144
      %v1177 = vadd.f32 %v980, %v1145
      %v1178 = vadd.f32 %v981, %v1146
      %v1179 = vadd.f32 %v982, %v1147
      %v1180 = vadd.f32 %v983, %v1148
      %v1181 = vadd.f32 %v984, %v1149
      %v1182 = vadd.f32 %v985, %v1150
      %v1183 = vadd.f32 %v986, %v1151
      %v1184 = vadd.f32 %v987, %v1152
      %v1185 = vadd.f32 %v988, %v1153
      %v1186 = vadd.f32 %v989, %v1154
      %v1187 = vadd.f32 %v990, %v1155
      %v1188 = vadd.f32 %v991, %v1156
      %v1189 = vadd.f32 %v992, %v1157
      %v1190 = vadd.f32 %v993, %v1158
      %v1191 = vadd.f32 %v994, %v1159
      %v1192 = vadd.f32 %v995, %v1160
      %v1193 = vadd.f32 %v996, %v1161
      %v1194 = vadd.f32 %v997, %v1162
      %v1195 = vadd.f32 %v998, %v1163
      %v1196 = vadd.f32 %v999, %v1164
      %v1197 = vadd.f32 %v1000, %v1165
      %v1198 = vadd.f32 %v1001, %v1166
      %v1199 = vadd.f32 %v1002, %v1167
      %v1200 = vadd.f32 %v1003, %v1168
      %v1201 = vmax.f32 %v1169, 0.0
      %v1202 = vmax.f32 %v1170, 0.0
      %v1203 = vmax.f32 %v1171, 0.0
      %v1204 = vmax.f32 %v1172, 0.0
      %v1205 = vmax.f32 %v1173, 0.0
      %v1206 = vmax.f32 %v1174, 0.0
      %v1207 = vmax.f32 %v1175, 0.0
      %v1208 = vmax.f32 %v1176, 0.0
      %v1209 = vmax.f32 %v1177, 0.0
      %v1210 = vmax.f32 %v1178, 0.0
      %v1211 = vmax.f32 %v1179, 0.0
      %v1212 = vmax.f32 %v1180, 0.0
      %v1213 = vmax.f32 %v1181, 0.0
      %v1214 = vmax.f32 %v1182, 0.0
      %v1215 = vmax.f32 %v1183, 0.0
      %v1216 = vmax.f32 %v1184, 0.0
      %v1217 = vmax.f32 %v1185, 0.0
      %v1218 = vmax.f32 %v1186, 0.0
      %v1219 = vmax.f32 %v1187, 0.0
      %v1220 = vmax.f32 %v1188, 0.0
      %v1221 = vmax.f32 %v1189, 0.0
      %v1222 = vmax.f32 %v1190, 0.0
      %v1223 = vmax.f32 %v1191, 0.0
      %v1224 = vmax.f32 %v1192, 0.0
      %v1225 = vmax.f32 %v1193, 0.0
      %v1226 = vmax.f32 %v1194, 0.0
      %v1227 = vmax.f32 %v1195, 0.0
      %v1228 = vmax.f32 %v1196, 0.0
      %v1229 = vmax.f32 %v1197, 0.0
      %v1230 = vmax.f32 %v1198, 0.0
      %v1231 = vmax.f32 %v1199, 0.0
      %v1232 = vmax.f32 %v1200, 0.0
      %v1233 = vpack.c.bf16 %v1202, %v1201
      %v1234 = vpack.c.bf16 %v1204, %v1203
      %v1235 = vpack.c.bf16 %v1206, %v1205
      %v1236 = vpack.c.bf16 %v1208, %v1207
      %v1237 = vpack.c.bf16 %v1210, %v1209
      %v1238 = vpack.c.bf16 %v1212, %v1211
      %v1239 = vpack.c.bf16 %v1214, %v1213
      %v1240 = vpack.c.bf16 %v1216, %v1215
      %v1241 = vpack.c.bf16 %v1218, %v1217
      %v1242 = vpack.c.bf16 %v1220, %v1219
      %v1243 = vpack.c.bf16 %v1222, %v1221
      %v1244 = vpack.c.bf16 %v1224, %v1223
      %v1245 = vpack.c.bf16 %v1226, %v1225
      %v1246 = vpack.c.bf16 %v1228, %v1227
      %v1247 = vpack.c.bf16 %v1230, %v1229
      %v1248 = vpack.c.bf16 %v1232, %v1231
      %v1249 = vld [vmem:[%s3] sm:$0xf]
      %v1250 = vld [vmem:[%s3 + $0x4] sm:$0xf]
      %v1251 = vld [vmem:[%s3 + $0x8] sm:$0xf]
      %v1252 = vld [vmem:[%s3 + $0xc] sm:$0xf]
      %v1253 = vld [vmem:[%s3 + $0x10] sm:$0xf]
      %v1254 = vld [vmem:[%s3 + $0x14] sm:$0xf]
      %v1255 = vld [vmem:[%s3 + $0x18] sm:$0xf]
      %v1256 = vld [vmem:[%s3 + $0x1c] sm:$0xf]
      %v1257 = vld [vmem:[%s3 + $0x20] sm:$0xf]
      %v1258 = vld [vmem:[%s3 + $0x24] sm:$0xf]
      %v1259 = vld [vmem:[%s3 + $0x28] sm:$0xf]
      %v1260 = vld [vmem:[%s3 + $0x2c] sm:$0xf]
      %v1261 = vld [vmem:[%s3 + $0x30] sm:$0xf]
      %v1262 = vld [vmem:[%s3 + $0x34] sm:$0xf]
      %v1263 = vld [vmem:[%s3 + $0x38] sm:$0xf]
      %v1264 = vld [vmem:[%s3 + $0x3c] sm:$0xf]
      %v1265 = vld [vmem:[%s4] sm:$0x1]
      %v1267 = vlaneseq
      %v1268 = vshrl.u32 %v1267, 7
      %v1269 = vsub.s32 0, %v1268
      %v1270 = vrot.slane %v1265, %v1269
      %v1288 = vunpack.c.l.b16 %v1249
      %v1289 = vunpack.c.l.b16 %v1250
      %v1290 = vunpack.c.l.b16 %v1251
      %v1291 = vunpack.c.l.b16 %v1252
      %v1292 = vunpack.c.l.b16 %v1253
      %v1293 = vunpack.c.l.b16 %v1254
      %v1294 = vunpack.c.l.b16 %v1255
      %v1295 = vunpack.c.l.b16 %v1256
      %v1296 = vunpack.c.l.b16 %v1257
      %v1297 = vunpack.c.l.b16 %v1258
      %v1298 = vunpack.c.l.b16 %v1259
      %v1299 = vunpack.c.l.b16 %v1260
      %v1300 = vunpack.c.l.b16 %v1261
      %v1301 = vunpack.c.l.b16 %v1262
      %v1302 = vunpack.c.l.b16 %v1263
      %v1303 = vunpack.c.l.b16 %v1264
      %v1304 = vpack.c.b16 %v1289, %v1288
      %v1305 = vpack.c.b16 %v1291, %v1290
      %v1306 = vpack.c.b16 %v1293, %v1292
      %v1307 = vpack.c.b16 %v1295, %v1294
      %v1308 = vpack.c.b16 %v1297, %v1296
      %v1309 = vpack.c.b16 %v1299, %v1298
      %v1310 = vpack.c.b16 %v1301, %v1300
      %v1311 = vpack.c.b16 %v1303, %v1302
      %1320 = vmatprep.subr.bf16.mxu0 0
      %1321 = vmatpush1.bf16.msra.mxu0 %v1304
      %1322 = vmatprep.subr.bf16.mxu0 0
      %1323 = vmatpush1.bf16.msra.mxu0 %v1305
      %1324 = vmatprep.subr.bf16.mxu0 0
      %1325 = vmatpush1.bf16.msra.mxu0 %v1306
      %1326 = vmatprep.subr.bf16.mxu0 0
      %1327 = vmatpush1.bf16.msra.mxu0 %v1307
      %1328 = vmatprep.subr.bf16.mxu0 0
      %1329 = vmatpush1.bf16.msra.mxu0 %v1308
      %1330 = vmatprep.subr.bf16.mxu0 0
      %1331 = vmatpush1.bf16.msra.mxu0 %v1309
      %1332 = vmatprep.subr.bf16.mxu0 0
      %1333 = vmatpush1.bf16.msra.mxu0 %v1310
      %1334 = vmatprep.subr.bf16.mxu0 0
      %1335 = vmatpush1.bf16.msra.mxu0 %v1311
      %1336 = vmatprep.subr.bf16.mxu0 0
      %1337 = vmatpush1.bf16.msra.mxu0 0
      %1338 = vmatprep.subr.bf16.mxu0 0
      %1339 = vmatpush1.bf16.msra.mxu0 0
      %1340 = vmatprep.subr.bf16.mxu0 0
      %1341 = vmatpush1.bf16.msra.mxu0 0
      %1342 = vmatprep.subr.bf16.mxu0 0
      %1343 = vmatpush1.bf16.msra.mxu0 0
      %1344 = vmatprep.subr.bf16.mxu0 0
      %1345 = vmatpush1.bf16.msra.mxu0 0
      %1346 = vmatprep.subr.bf16.mxu0 0
      %1347 = vmatpush1.bf16.msra.mxu0 0
      %1348 = vmatprep.subr.bf16.mxu0 0
      %1349 = vmatpush1.bf16.msra.mxu0 0
      %1350 = vmatprep.subr.bf16.mxu0 0
      %1351 = vmatpush1.bf16.msra.mxu0 0
      %1352 = vmatprep.mubr.bf16.mxu0 0
      %1353 = vmatmul.mubr.bf16.gmra.mrb[0].mxu0 %v1233
      %v1354 = vpop.f32.mrb[0].mxu0
      %v1355 = vadd.f32 %v1270, %v1354
      %v1356 = vpop.f32.mrb[0].mxu0
      %v1357 = vpop.f32.mrb[0].mxu0
      %v1358 = vadd.f32 %v1270, %v1357
      %v1359 = vpop.f32.mrb[0].mxu0
      %1360 = vmatprep.mubr.bf16.mxu0 0
      %1361 = vmatmul.mubr.bf16.gmra.mrb[0].mxu0 %v1234
      %v1362 = vpop.f32.mrb[0].mxu0
      %v1363 = vadd.f32 %v1270, %v1362
      %v1364 = vpop.f32.mrb[0].mxu0
      %v1365 = vpop.f32.mrb[0].mxu0
      %v1366 = vadd.f32 %v1270, %v1365
      %v1367 = vpop.f32.mrb[0].mxu0
      %1368 = vmatprep.mubr.bf16.mxu0 0
      %1369 = vmatmul.mubr.bf16.gmra.mrb[0].mxu0 %v1235
      %v1370 = vpop.f32.mrb[0].mxu0
      %v1371 = vadd.f32 %v1270, %v1370
      %v1372 = vpop.f32.mrb[0].mxu0
      %v1373 = vpop.f32.mrb[0].mxu0
      %v1374 = vadd.f32 %v1270, %v1373
      %v1375 = vpop.f32.mrb[0].mxu0
      %1376 = vmatprep.mubr.bf16.mxu0 0
      %1377 = vmatmul.mubr.bf16.gmra.mrb[0].mxu0 %v1236
      %v1378 = vpop.f32.mrb[0].mxu0
      %v1379 = vadd.f32 %v1270, %v1378
      %v1380 = vpop.f32.mrb[0].mxu0
      %v1381 = vpop.f32.mrb[0].mxu0
      %v1382 = vadd.f32 %v1270, %v1381
      %v1383 = vpop.f32.mrb[0].mxu0
      %1384 = vmatprep.mubr.bf16.mxu0 0
      %1385 = vmatmul.mubr.bf16.gmra.mrb[0].mxu0 %v1237
      %v1386 = vpop.f32.mrb[0].mxu0
      %v1387 = vadd.f32 %v1270, %v1386
      %v1388 = vpop.f32.mrb[0].mxu0
      %v1389 = vpop.f32.mrb[0].mxu0
      %v1390 = vadd.f32 %v1270, %v1389
      %v1391 = vpop.f32.mrb[0].mxu0
      %1392 = vmatprep.mubr.bf16.mxu0 0
      %1393 = vmatmul.mubr.bf16.gmra.mrb[0].mxu0 %v1238
      %v1394 = vpop.f32.mrb[0].mxu0
      %v1395 = vadd.f32 %v1270, %v1394
      %v1396 = vpop.f32.mrb[0].mxu0
      %v1397 = vpop.f32.mrb[0].mxu0
      %v1398 = vadd.f32 %v1270, %v1397
      %v1399 = vpop.f32.mrb[0].mxu0
      %1400 = vmatprep.mubr.bf16.mxu0 0
      %1401 = vmatmul.mubr.bf16.gmra.mrb[0].mxu0 %v1239
      %v1402 = vpop.f32.mrb[0].mxu0
      %v1403 = vadd.f32 %v1270, %v1402
      %v1404 = vpop.f32.mrb[0].mxu0
      %v1405 = vpop.f32.mrb[0].mxu0
      %v1406 = vadd.f32 %v1270, %v1405
      %v1407 = vpop.f32.mrb[0].mxu0
      %1408 = vmatprep.mubr.bf16.mxu0 0
      %1409 = vmatmul.mubr.bf16.gmra.mrb[0].mxu0 %v1240
      %v1410 = vpop.f32.mrb[0].mxu0
      %v1411 = vadd.f32 %v1270, %v1410
      %v1412 = vpop.f32.mrb[0].mxu0
      %v1413 = vpop.f32.mrb[0].mxu0
      %v1414 = vadd.f32 %v1270, %v1413
      %v1415 = vpop.f32.mrb[0].mxu0
      %1416 = vmatprep.mubr.bf16.mxu0 0
      %1417 = vmatmul.mubr.bf16.gmra.mrb[0].mxu0 %v1241
      %v1418 = vpop.f32.mrb[0].mxu0
      %v1419 = vadd.f32 %v1270, %v1418
      %v1420 = vpop.f32.mrb[0].mxu0
      %v1421 = vpop.f32.mrb[0].mxu0
      %v1422 = vadd.f32 %v1270, %v1421
      %v1423 = vpop.f32.mrb[0].mxu0
      %1424 = vmatprep.mubr.bf16.mxu0 0
      %1425 = vmatmul.mubr.bf16.gmra.mrb[0].mxu0 %v1242
      %v1426 = vpop.f32.mrb[0].mxu0
      %v1427 = vadd.f32 %v1270, %v1426
      %v1428 = vpop.f32.mrb[0].mxu0
      %v1429 = vpop.f32.mrb[0].mxu0
      %v1430 = vadd.f32 %v1270, %v1429
      %v1431 = vpop.f32.mrb[0].mxu0
      %1432 = vmatprep.mubr.bf16.mxu0 0
      %1433 = vmatmul.mubr.bf16.gmra.mrb[0].mxu0 %v1243
      %v1434 = vpop.f32.mrb[0].mxu0
      %v1435 = vadd.f32 %v1270, %v1434
      %v1436 = vpop.f32.mrb[0].mxu0
      %v1437 = vpop.f32.mrb[0].mxu0
      %v1438 = vadd.f32 %v1270, %v1437
      %v1439 = vpop.f32.mrb[0].mxu0
      %1440 = vmatprep.mubr.bf16.mxu0 0
      %1441 = vmatmul.mubr.bf16.gmra.mrb[0].mxu0 %v1244
      %v1442 = vpop.f32.mrb[0].mxu0
      %v1443 = vadd.f32 %v1270, %v1442
      %v1444 = vpop.f32.mrb[0].mxu0
      %v1445 = vpop.f32.mrb[0].mxu0
      %v1446 = vadd.f32 %v1270, %v1445
      %v1447 = vpop.f32.mrb[0].mxu0
      %1448 = vmatprep.mubr.bf16.mxu0 0
      %1449 = vmatmul.mubr.bf16.gmra.mrb[0].mxu0 %v1245
      %v1450 = vpop.f32.mrb[0].mxu0
      %v1451 = vadd.f32 %v1270, %v1450
      %v1452 = vpop.f32.mrb[0].mxu0
      %v1453 = vpop.f32.mrb[0].mxu0
      %v1454 = vadd.f32 %v1270, %v1453
      %v1455 = vpop.f32.mrb[0].mxu0
      %1456 = vmatprep.mubr.bf16.mxu0 0
      %1457 = vmatmul.mubr.bf16.gmra.mrb[0].mxu0 %v1246
      %v1458 = vpop.f32.mrb[0].mxu0
      %v1459 = vadd.f32 %v1270, %v1458
      %v1460 = vpop.f32.mrb[0].mxu0
      %v1461 = vpop.f32.mrb[0].mxu0
      %v1462 = vadd.f32 %v1270, %v1461
      %v1463 = vpop.f32.mrb[0].mxu0
      %1464 = vmatprep.mubr.bf16.mxu0 0
      %1465 = vmatmul.mubr.bf16.gmra.mrb[0].mxu0 %v1247
      %v1466 = vpop.f32.mrb[0].mxu0
      %v1467 = vadd.f32 %v1270, %v1466
      %v1468 = vpop.f32.mrb[0].mxu0
      %v1469 = vpop.f32.mrb[0].mxu0
      %v1470 = vadd.f32 %v1270, %v1469
      %v1471 = vpop.f32.mrb[0].mxu0
      %1472 = vmatprep.mubr.bf16.mxu0 0
      %1473 = vmatmul.mubr.bf16.gmra.mrb[0].mxu0 %v1248
      %v1474 = vpop.f32.mrb[0].mxu0
      %v1475 = vadd.f32 %v1270, %v1474
      %v1476 = vpop.f32.mrb[0].mxu0
      %v1477 = vpop.f32.mrb[0].mxu0
      %v1478 = vadd.f32 %v1270, %v1477
      %v1479 = vpop.f32.mrb[0].mxu0
      %1480 = vdwg.mxu0
      %v1481 = vmax.f32 %v1355, 0.0
      %v1482 = vmax.f32 %v1358, 0.0
      %v1483 = vmax.f32 %v1363, 0.0
      %v1484 = vmax.f32 %v1366, 0.0
      %v1485 = vmax.f32 %v1371, 0.0
      %v1486 = vmax.f32 %v1374, 0.0
      %v1487 = vmax.f32 %v1379, 0.0
      %v1488 = vmax.f32 %v1382, 0.0
      %v1489 = vmax.f32 %v1387, 0.0
      %v1490 = vmax.f32 %v1390, 0.0
      %v1491 = vmax.f32 %v1395, 0.0
      %v1492 = vmax.f32 %v1398, 0.0
      %v1493 = vmax.f32 %v1403, 0.0
      %v1494 = vmax.f32 %v1406, 0.0
      %v1495 = vmax.f32 %v1411, 0.0
      %v1496 = vmax.f32 %v1414, 0.0
      %v1497 = vmax.f32 %v1419, 0.0
      %v1498 = vmax.f32 %v1422, 0.0
      %v1499 = vmax.f32 %v1427, 0.0
      %v1500 = vmax.f32 %v1430, 0.0
      %v1501 = vmax.f32 %v1435, 0.0
      %v1502 = vmax.f32 %v1438, 0.0
      %v1503 = vmax.f32 %v1443, 0.0
      %v1504 = vmax.f32 %v1446, 0.0
      %v1505 = vmax.f32 %v1451, 0.0
      %v1506 = vmax.f32 %v1454, 0.0
      %v1507 = vmax.f32 %v1459, 0.0
      %v1508 = vmax.f32 %v1462, 0.0
      %v1509 = vmax.f32 %v1467, 0.0
      %v1510 = vmax.f32 %v1470, 0.0
      %v1511 = vmax.f32 %v1475, 0.0
      %v1512 = vmax.f32 %v1478, 0.0
      %v1513 = vpack.c.bf16 %v1482, %v1481
      %v1514 = vpack.c.bf16 %v1484, %v1483
      %v1515 = vpack.c.bf16 %v1486, %v1485
      %v1516 = vpack.c.bf16 %v1488, %v1487
      %v1517 = vpack.c.bf16 %v1490, %v1489
      %v1518 = vpack.c.bf16 %v1492, %v1491
      %v1519 = vpack.c.bf16 %v1494, %v1493
      %v1520 = vpack.c.bf16 %v1496, %v1495
      %v1521 = vpack.c.bf16 %v1498, %v1497
      %v1522 = vpack.c.bf16 %v1500, %v1499
      %v1523 = vpack.c.bf16 %v1502, %v1501
      %v1524 = vpack.c.bf16 %v1504, %v1503
      %v1525 = vpack.c.bf16 %v1506, %v1505
      %v1526 = vpack.c.bf16 %v1508, %v1507
      %v1527 = vpack.c.bf16 %v1510, %v1509
      %v1528 = vpack.c.bf16 %v1512, %v1511
      %v1529 = vld [vmem:[%s5] sm:$0xff]
      %v1530 = vld [vmem:[%s5 + $0x8] sm:$0xff]
      %v1531 = vld [vmem:[%s5 + $0x10] sm:$0xff]
      %v1532 = vld [vmem:[%s5 + $0x18] sm:$0xff]
      %v1533 = vld [vmem:[%s5 + $0x20] sm:$0xff]
      %v1534 = vld [vmem:[%s5 + $0x28] sm:$0xff]
      %v1535 = vld [vmem:[%s5 + $0x30] sm:$0xff]
      %v1536 = vld [vmem:[%s5 + $0x38] sm:$0xff]
      %v1537 = vld [vmem:[%s5 + $0x40] sm:$0xff]
      %v1538 = vld [vmem:[%s5 + $0x48] sm:$0xff]
      %v1539 = vld [vmem:[%s5 + $0x50] sm:$0xff]
      %v1540 = vld [vmem:[%s5 + $0x58] sm:$0xff]
      %v1541 = vld [vmem:[%s5 + $0x60] sm:$0xff]
      %v1542 = vld [vmem:[%s5 + $0x68] sm:$0xff]
      %v1543 = vld [vmem:[%s5 + $0x70] sm:$0xff]
      %v1544 = vld [vmem:[%s5 + $0x78] sm:$0xff]
      %v1545 = vld [vmem:[%s5 + $0x80] sm:$0xff]
      %v1546 = vld [vmem:[%s5 + $0x88] sm:$0xff]
      %v1547 = vld [vmem:[%s5 + $0x90] sm:$0xff]
      %v1548 = vld [vmem:[%s5 + $0x98] sm:$0xff]
      %v1549 = vld [vmem:[%s5 + $0xa0] sm:$0xff]
      %v1550 = vld [vmem:[%s5 + $0xa8] sm:$0xff]
      %v1551 = vld [vmem:[%s5 + $0xb0] sm:$0xff]
      %v1552 = vld [vmem:[%s5 + $0xb8] sm:$0xff]
      %v1553 = vld [vmem:[%s5 + $0xc0] sm:$0xff]
      %v1554 = vld [vmem:[%s5 + $0xc8] sm:$0xff]
      %v1555 = vld [vmem:[%s5 + $0xd0] sm:$0xff]
      %v1556 = vld [vmem:[%s5 + $0xd8] sm:$0xff]
      %v1557 = vld [vmem:[%s5 + $0xe0] sm:$0xff]
      %v1558 = vld [vmem:[%s5 + $0xe8] sm:$0xff]
      %v1559 = vld [vmem:[%s5 + $0xf0] sm:$0xff]
      %v1560 = vld [vmem:[%s5 + $0xf8] sm:$0xff]
      %v1561 = vld [vmem:[%s5 + $0x100] sm:$0xff]
      %v1562 = vld [vmem:[%s5 + $0x108] sm:$0xff]
      %v1563 = vld [vmem:[%s5 + $0x110] sm:$0xff]
      %v1564 = vld [vmem:[%s5 + $0x118] sm:$0xff]
      %v1565 = vld [vmem:[%s5 + $0x120] sm:$0xff]
      %v1566 = vld [vmem:[%s5 + $0x128] sm:$0xff]
      %v1567 = vld [vmem:[%s5 + $0x130] sm:$0xff]
      %v1568 = vld [vmem:[%s5 + $0x138] sm:$0xff]
      %v1569 = vld [vmem:[%s5 + $0x140] sm:$0xff]
      %v1570 = vld [vmem:[%s5 + $0x148] sm:$0xff]
      %v1571 = vld [vmem:[%s5 + $0x150] sm:$0xff]
      %v1572 = vld [vmem:[%s5 + $0x158] sm:$0xff]
      %v1573 = vld [vmem:[%s5 + $0x160] sm:$0xff]
      %v1574 = vld [vmem:[%s5 + $0x168] sm:$0xff]
      %v1575 = vld [vmem:[%s5 + $0x170] sm:$0xff]
      %v1576 = vld [vmem:[%s5 + $0x178] sm:$0xff]
      %v1577 = vld [vmem:[%s5 + $0x180] sm:$0xff]
      %v1578 = vld [vmem:[%s5 + $0x188] sm:$0xff]
      %v1579 = vld [vmem:[%s5 + $0x190] sm:$0xff]
      %v1580 = vld [vmem:[%s5 + $0x198] sm:$0xff]
      %v1581 = vld [vmem:[%s5 + $0x1a0] sm:$0xff]
      %v1582 = vld [vmem:[%s5 + $0x1a8] sm:$0xff]
      %v1583 = vld [vmem:[%s5 + $0x1b0] sm:$0xff]
      %v1584 = vld [vmem:[%s5 + $0x1b8] sm:$0xff]
      %v1585 = vld [vmem:[%s5 + $0x1c0] sm:$0xff]
      %v1586 = vld [vmem:[%s5 + $0x1c8] sm:$0xff]
      %v1587 = vld [vmem:[%s5 + $0x1d0] sm:$0xff]
      %v1588 = vld [vmem:[%s5 + $0x1d8] sm:$0xff]
      %v1589 = vld [vmem:[%s5 + $0x1e0] sm:$0xff]
      %v1590 = vld [vmem:[%s5 + $0x1e8] sm:$0xff]
      %v1591 = vld [vmem:[%s5 + $0x1f0] sm:$0xff]
      %v1592 = vld [vmem:[%s5 + $0x1f8] sm:$0xff]
      %v1593 = vld [vmem:[%s6] sm:$0xff]
      %v1595 = vlaneseq
      %v1596 = vshrl.u32 %v1595, 7
      %v1597 = vsub.s32 0, %v1596
      %v1598 = vrot.slane %v1593, %v1597
      %v1599 = vlaneseq
      %v1600 = vshrl.u32 %v1599, 7
      %v1601 = vsub.s32 1, %v1600
      %v1602 = vrot.slane %v1593, %v1601
      %v1603 = vlaneseq
      %v1604 = vshrl.u32 %v1603, 7
      %v1605 = vsub.s32 2, %v1604
      %v1606 = vrot.slane %v1593, %v1605
      %v1607 = vlaneseq
      %v1608 = vshrl.u32 %v1607, 7
      %v1609 = vsub.s32 3, %v1608
      %v1610 = vrot.slane %v1593, %v1609
      %v1611 = vlaneseq
      %v1612 = vshrl.u32 %v1611, 7
      %v1613 = vsub.s32 4, %v1612
      %v1614 = vrot.slane %v1593, %v1613
      %v1615 = vlaneseq
      %v1616 = vshrl.u32 %v1615, 7
      %v1617 = vsub.s32 5, %v1616
      %v1618 = vrot.slane %v1593, %v1617
      %v1619 = vlaneseq
      %v1620 = vshrl.u32 %v1619, 7
      %v1621 = vsub.s32 6, %v1620
      %v1622 = vrot.slane %v1593, %v1621
      %v1623 = vlaneseq
      %v1624 = vshrl.u32 %v1623, 7
      %v1625 = vsub.s32 7, %v1624
      %v1626 = vrot.slane %v1593, %v1625
      %v1699 = vunpack.c.l.b16 %v1529
      %v1700 = vunpack.c.h.b16 %v1529
      %v1701 = vunpack.c.l.b16 %v1530
      %v1702 = vunpack.c.h.b16 %v1530
      %v1703 = vunpack.c.l.b16 %v1531
      %v1704 = vunpack.c.h.b16 %v1531
      %v1705 = vunpack.c.l.b16 %v1532
      %v1706 = vunpack.c.h.b16 %v1532
      %v1707 = vunpack.c.l.b16 %v1533
      %v1708 = vunpack.c.h.b16 %v1533
      %v1709 = vunpack.c.l.b16 %v1534
      %v1710 = vunpack.c.h.b16 %v1534
      %v1711 = vunpack.c.l.b16 %v1535
      %v1712 = vunpack.c.h.b16 %v1535
      %v1713 = vunpack.c.l.b16 %v1536
      %v1714 = vunpack.c.h.b16 %v1536
      %v1715 = vunpack.c.l.b16 %v1537
      %v1716 = vunpack.c.h.b16 %v1537
      %v1717 = vunpack.c.l.b16 %v1538
      %v1718 = vunpack.c.h.b16 %v1538
      %v1719 = vunpack.c.l.b16 %v1539
      %v1720 = vunpack.c.h.b16 %v1539
      %v1721 = vunpack.c.l.b16 %v1540
      %v1722 = vunpack.c.h.b16 %v1540
      %v1723 = vunpack.c.l.b16 %v1541
      %v1724 = vunpack.c.h.b16 %v1541
      %v1725 = vunpack.c.l.b16 %v1542
      %v1726 = vunpack.c.h.b16 %v1542
      %v1727 = vunpack.c.l.b16 %v1543
      %v1728 = vunpack.c.h.b16 %v1543
      %v1729 = vunpack.c.l.b16 %v1544
      %v1730 = vunpack.c.h.b16 %v1544
      %v1731 = vunpack.c.l.b16 %v1545
      %v1732 = vunpack.c.h.b16 %v1545
      %v1733 = vunpack.c.l.b16 %v1546
      %v1734 = vunpack.c.h.b16 %v1546
      %v1735 = vunpack.c.l.b16 %v1547
      %v1736 = vunpack.c.h.b16 %v1547
      %v1737 = vunpack.c.l.b16 %v1548
      %v1738 = vunpack.c.h.b16 %v1548
      %v1739 = vunpack.c.l.b16 %v1549
      %v1740 = vunpack.c.h.b16 %v1549
      %v1741 = vunpack.c.l.b16 %v1550
      %v1742 = vunpack.c.h.b16 %v1550
      %v1743 = vunpack.c.l.b16 %v1551
      %v1744 = vunpack.c.h.b16 %v1551
      %v1745 = vunpack.c.l.b16 %v1552
      %v1746 = vunpack.c.h.b16 %v1552
      %v1747 = vunpack.c.l.b16 %v1553
      %v1748 = vunpack.c.h.b16 %v1553
      %v1749 = vunpack.c.l.b16 %v1554
      %v1750 = vunpack.c.h.b16 %v1554
      %v1751 = vunpack.c.l.b16 %v1555
      %v1752 = vunpack.c.h.b16 %v1555
      %v1753 = vunpack.c.l.b16 %v1556
      %v1754 = vunpack.c.h.b16 %v1556
      %v1755 = vunpack.c.l.b16 %v1557
      %v1756 = vunpack.c.h.b16 %v1557
      %v1757 = vunpack.c.l.b16 %v1558
      %v1758 = vunpack.c.h.b16 %v1558
      %v1759 = vunpack.c.l.b16 %v1559
      %v1760 = vunpack.c.h.b16 %v1559
      %v1761 = vunpack.c.l.b16 %v1560
      %v1762 = vunpack.c.h.b16 %v1560
      %v1763 = vunpack.c.l.b16 %v1561
      %v1764 = vunpack.c.h.b16 %v1561
      %v1765 = vunpack.c.l.b16 %v1562
      %v1766 = vunpack.c.h.b16 %v1562
      %v1767 = vunpack.c.l.b16 %v1563
      %v1768 = vunpack.c.h.b16 %v1563
      %v1769 = vunpack.c.l.b16 %v1564
      %v1770 = vunpack.c.h.b16 %v1564
      %v1771 = vunpack.c.l.b16 %v1565
      %v1772 = vunpack.c.h.b16 %v1565
      %v1773 = vunpack.c.l.b16 %v1566
      %v1774 = vunpack.c.h.b16 %v1566
      %v1775 = vunpack.c.l.b16 %v1567
      %v1776 = vunpack.c.h.b16 %v1567
      %v1777 = vunpack.c.l.b16 %v1568
      %v1778 = vunpack.c.h.b16 %v1568
      %v1779 = vunpack.c.l.b16 %v1569
      %v1780 = vunpack.c.h.b16 %v1569
      %v1781 = vunpack.c.l.b16 %v1570
      %v1782 = vunpack.c.h.b16 %v1570
      %v1783 = vunpack.c.l.b16 %v1571
      %v1784 = vunpack.c.h.b16 %v1571
      %v1785 = vunpack.c.l.b16 %v1572
      %v1786 = vunpack.c.h.b16 %v1572
      %v1787 = vunpack.c.l.b16 %v1573
      %v1788 = vunpack.c.h.b16 %v1573
      %v1789 = vunpack.c.l.b16 %v1574
      %v1790 = vunpack.c.h.b16 %v1574
      %v1791 = vunpack.c.l.b16 %v1575
      %v1792 = vunpack.c.h.b16 %v1575
      %v1793 = vunpack.c.l.b16 %v1576
      %v1794 = vunpack.c.h.b16 %v1576
      %v1795 = vunpack.c.l.b16 %v1577
      %v1796 = vunpack.c.h.b16 %v1577
      %v1797 = vunpack.c.l.b16 %v1578
      %v1798 = vunpack.c.h.b16 %v1578
      %v1799 = vunpack.c.l.b16 %v1579
      %v1800 = vunpack.c.h.b16 %v1579
      %v1801 = vunpack.c.l.b16 %v1580
      %v1802 = vunpack.c.h.b16 %v1580
      %v1803 = vunpack.c.l.b16 %v1581
      %v1804 = vunpack.c.h.b16 %v1581
      %v1805 = vunpack.c.l.b16 %v1582
      %v1806 = vunpack.c.h.b16 %v1582
      %v1807 = vunpack.c.l.b16 %v1583
      %v1808 = vunpack.c.h.b16 %v1583
      %v1809 = vunpack.c.l.b16 %v1584
      %v1810 = vunpack.c.h.b16 %v1584
      %v1811 = vunpack.c.l.b16 %v1585
      %v1812 = vunpack.c.h.b16 %v1585
      %v1813 = vunpack.c.l.b16 %v1586
      %v1814 = vunpack.c.h.b16 %v1586
      %v1815 = vunpack.c.l.b16 %v1587
      %v1816 = vunpack.c.h.b16 %v1587
      %v1817 = vunpack.c.l.b16 %v1588
      %v1818 = vunpack.c.h.b16 %v1588
      %v1819 = vunpack.c.l.b16 %v1589
      %v1820 = vunpack.c.h.b16 %v1589
      %v1821 = vunpack.c.l.b16 %v1590
      %v1822 = vunpack.c.h.b16 %v1590
      %v1823 = vunpack.c.l.b16 %v1591
      %v1824 = vunpack.c.h.b16 %v1591
      %v1825 = vunpack.c.l.b16 %v1592
      %v1826 = vunpack.c.h.b16 %v1592
      %v1827 = vpack.c.b16 %v1707, %v1699
      %v1828 = vpack.c.b16 %v1708, %v1700
      %v1829 = vpack.c.b16 %v1709, %v1701
      %v1830 = vpack.c.b16 %v1710, %v1702
      %v1831 = vpack.c.b16 %v1711, %v1703
      %v1832 = vpack.c.b16 %v1712, %v1704
      %v1833 = vpack.c.b16 %v1713, %v1705
      %v1834 = vpack.c.b16 %v1714, %v1706
      %v1835 = vpack.c.b16 %v1723, %v1715
      %v1836 = vpack.c.b16 %v1724, %v1716
      %v1837 = vpack.c.b16 %v1725, %v1717
      %v1838 = vpack.c.b16 %v1726, %v1718
      %v1839 = vpack.c.b16 %v1727, %v1719
      %v1840 = vpack.c.b16 %v1728, %v1720
      %v1841 = vpack.c.b16 %v1729, %v1721
      %v1842 = vpack.c.b16 %v1730, %v1722
      %v1843 = vpack.c.b16 %v1739, %v1731
      %v1844 = vpack.c.b16 %v1740, %v1732
      %v1845 = vpack.c.b16 %v1741, %v1733
      %v1846 = vpack.c.b16 %v1742, %v1734
      %v1847 = vpack.c.b16 %v1743, %v1735
      %v1848 = vpack.c.b16 %v1744, %v1736
      %v1849 = vpack.c.b16 %v1745, %v1737
      %v1850 = vpack.c.b16 %v1746, %v1738
      %v1851 = vpack.c.b16 %v1755, %v1747
      %v1852 = vpack.c.b16 %v1756, %v1748
      %v1853 = vpack.c.b16 %v1757, %v1749
      %v1854 = vpack.c.b16 %v1758, %v1750
      %v1855 = vpack.c.b16 %v1759, %v1751
      %v1856 = vpack.c.b16 %v1760, %v1752
      %v1857 = vpack.c.b16 %v1761, %v1753
      %v1858 = vpack.c.b16 %v1762, %v1754
      %v1859 = vpack.c.b16 %v1771, %v1763
      %v1860 = vpack.c.b16 %v1772, %v1764
      %v1861 = vpack.c.b16 %v1773, %v1765
      %v1862 = vpack.c.b16 %v1774, %v1766
      %v1863 = vpack.c.b16 %v1775, %v1767
      %v1864 = vpack.c.b16 %v1776, %v1768
      %v1865 = vpack.c.b16 %v1777, %v1769
      %v1866 = vpack.c.b16 %v1778, %v1770
      %v1867 = vpack.c.b16 %v1787, %v1779
      %v1868 = vpack.c.b16 %v1788, %v1780
      %v1869 = vpack.c.b16 %v1789, %v1781
      %v1870 = vpack.c.b16 %v1790, %v1782
      %v1871 = vpack.c.b16 %v1791, %v1783
      %v1872 = vpack.c.b16 %v1792, %v1784
      %v1873 = vpack.c.b16 %v1793, %v1785
      %v1874 = vpack.c.b16 %v1794, %v1786
      %v1875 = vpack.c.b16 %v1803, %v1795
      %v1876 = vpack.c.b16 %v1804, %v1796
      %v1877 = vpack.c.b16 %v1805, %v1797
      %v1878 = vpack.c.b16 %v1806, %v1798
      %v1879 = vpack.c.b16 %v1807, %v1799
      %v1880 = vpack.c.b16 %v1808, %v1800
      %v1881 = vpack.c.b16 %v1809, %v1801
      %v1882 = vpack.c.b16 %v1810, %v1802
      %v1883 = vpack.c.b16 %v1819, %v1811
      %v1884 = vpack.c.b16 %v1820, %v1812
      %v1885 = vpack.c.b16 %v1821, %v1813
      %v1886 = vpack.c.b16 %v1822, %v1814
      %v1887 = vpack.c.b16 %v1823, %v1815
      %v1888 = vpack.c.b16 %v1824, %v1816
      %v1889 = vpack.c.b16 %v1825, %v1817
      %v1890 = vpack.c.b16 %v1826, %v1818
      %1955 = vmatprep.subr.bf16.mxu0 %v1828
      %1956 = vmatpush1.bf16.msra.mxu0 %v1827
      %1957 = vmatprep.subr.bf16.mxu0 %v1836
      %1958 = vmatpush1.bf16.msra.mxu0 %v1835
      %1959 = vmatprep.subr.bf16.mxu0 %v1844
      %1960 = vmatpush1.bf16.msra.mxu0 %v1843
      %1961 = vmatprep.subr.bf16.mxu0 %v1852
      %1962 = vmatpush1.bf16.msra.mxu0 %v1851
      %1963 = vmatprep.subr.bf16.mxu0 %v1860
      %1964 = vmatpush1.bf16.msra.mxu0 %v1859
      %1965 = vmatprep.subr.bf16.mxu0 %v1868
      %1966 = vmatpush1.bf16.msra.mxu0 %v1867
      %1967 = vmatprep.subr.bf16.mxu0 %v1876
      %1968 = vmatpush1.bf16.msra.mxu0 %v1875
      %1969 = vmatprep.subr.bf16.mxu0 %v1884
      %1970 = vmatpush1.bf16.msra.mxu0 %v1883
      %1971 = vmatprep.subr.bf16.mxu0 0
      %1972 = vmatpush1.bf16.msra.mxu0 0
      %1973 = vmatprep.subr.bf16.mxu0 0
      %1974 = vmatpush1.bf16.msra.mxu0 0
      %1975 = vmatprep.subr.bf16.mxu0 0
      %1976 = vmatpush1.bf16.msra.mxu0 0
      %1977 = vmatprep.subr.bf16.mxu0 0
      %1978 = vmatpush1.bf16.msra.mxu0 0
      %1979 = vmatprep.subr.bf16.mxu0 0
      %1980 = vmatpush1.bf16.msra.mxu0 0
      %1981 = vmatprep.subr.bf16.mxu0 0
      %1982 = vmatpush1.bf16.msra.mxu0 0
      %1983 = vmatprep.subr.bf16.mxu0 0
      %1984 = vmatpush1.bf16.msra.mxu0 0
      %1985 = vmatprep.subr.bf16.mxu0 0
      %1986 = vmatpush1.bf16.msra.mxu0 0
      %1987 = vmatprep.mubr.bf16.mxu0 0
      %1988 = vmatmul.mubr.bf16.gmra.mrb[0].mxu0 %v1513
      %v1989 = vpop.f32.mrb[0].mxu0
      %v1990 = vadd.f32 %v1598, %v1989
      %v1991 = vpop.f32.mrb[0].mxu0
      %v1992 = vadd.f32 %v1602, %v1991
      %v1993 = vpop.f32.mrb[0].mxu0
      %v1994 = vadd.f32 %v1598, %v1993
      %v1995 = vpop.f32.mrb[0].mxu0
      %v1996 = vadd.f32 %v1602, %v1995
      %1997 = vmatprep.mubr.bf16.mxu0 0
      %1998 = vmatmul.mubr.bf16.gmra.mrb[0].mxu0 %v1514
      %v1999 = vpop.f32.mrb[0].mxu0
      %v2000 = vadd.f32 %v1598, %v1999
      %v2001 = vpop.f32.mrb[0].mxu0
      %v2002 = vadd.f32 %v1602, %v2001
      %v2003 = vpop.f32.mrb[0].mxu0
      %v2004 = vadd.f32 %v1598, %v2003
      %v2005 = vpop.f32.mrb[0].mxu0
      %v2006 = vadd.f32 %v1602, %v2005
      %2007 = vmatprep.mubr.bf16.mxu0 0
      %2008 = vmatmul.mubr.bf16.gmra.mrb[0].mxu0 %v1515
      %v2009 = vpop.f32.mrb[0].mxu0
      %v2010 = vadd.f32 %v1598, %v2009
      %v2011 = vpop.f32.mrb[0].mxu0
      %v2012 = vadd.f32 %v1602, %v2011
      %v2013 = vpop.f32.mrb[0].mxu0
      %v2014 = vadd.f32 %v1598, %v2013
      %v2015 = vpop.f32.mrb[0].mxu0
      %v2016 = vadd.f32 %v1602, %v2015
      %2017 = vmatprep.mubr.bf16.mxu0 0
      %2018 = vmatmul.mubr.bf16.gmra.mrb[0].mxu0 %v1516
      %v2019 = vpop.f32.mrb[0].mxu0
      %v2020 = vadd.f32 %v1598, %v2019
      %v2021 = vpop.f32.mrb[0].mxu0
      %v2022 = vadd.f32 %v1602, %v2021
      %v2023 = vpop.f32.mrb[0].mxu0
      %v2024 = vadd.f32 %v1598, %v2023
      %v2025 = vpop.f32.mrb[0].mxu0
      %v2026 = vadd.f32 %v1602, %v2025
      %2027 = vmatprep.mubr.bf16.mxu0 0
      %2028 = vmatmul.mubr.bf16.gmra.mrb[0].mxu0 %v1517
      %v2029 = vpop.f32.mrb[0].mxu0
      %v2030 = vadd.f32 %v1598, %v2029
      %v2031 = vpop.f32.mrb[0].mxu0
      %v2032 = vadd.f32 %v1602, %v2031
      %v2033 = vpop.f32.mrb[0].mxu0
      %v2034 = vadd.f32 %v1598, %v2033
      %v2035 = vpop.f32.mrb[0].mxu0
      %v2036 = vadd.f32 %v1602, %v2035
      %2037 = vmatprep.mubr.bf16.mxu0 0
      %2038 = vmatmul.mubr.bf16.gmra.mrb[0].mxu0 %v1518
      %v2039 = vpop.f32.mrb[0].mxu0
      %v2040 = vadd.f32 %v1598, %v2039
      %v2041 = vpop.f32.mrb[0].mxu0
      %v2042 = vadd.f32 %v1602, %v2041
      %v2043 = vpop.f32.mrb[0].mxu0
      %v2044 = vadd.f32 %v1598, %v2043
      %v2045 = vpop.f32.mrb[0].mxu0
      %v2046 = vadd.f32 %v1602, %v2045
      %2047 = vmatprep.mubr.bf16.mxu0 0
      %2048 = vmatmul.mubr.bf16.gmra.mrb[0].mxu0 %v1519
      %v2049 = vpop.f32.mrb[0].mxu0
      %v2050 = vadd.f32 %v1598, %v2049
      %v2051 = vpop.f32.mrb[0].mxu0
      %v2052 = vadd.f32 %v1602, %v2051
      %v2053 = vpop.f32.mrb[0].mxu0
      %v2054 = vadd.f32 %v1598, %v2053
      %v2055 = vpop.f32.mrb[0].mxu0
      %v2056 = vadd.f32 %v1602, %v2055
      %2057 = vmatprep.mubr.bf16.mxu0 0
      %2058 = vmatmul.mubr.bf16.gmra.mrb[0].mxu0 %v1520
      %v2059 = vpop.f32.mrb[0].mxu0
      %v2060 = vadd.f32 %v1598, %v2059
      %v2061 = vpop.f32.mrb[0].mxu0
      %v2062 = vadd.f32 %v1602, %v2061
      %v2063 = vpop.f32.mrb[0].mxu0
      %v2064 = vadd.f32 %v1598, %v2063
      %v2065 = vpop.f32.mrb[0].mxu0
      %v2066 = vadd.f32 %v1602, %v2065
      %2067 = vmatprep.mubr.bf16.mxu0 0
      %2068 = vmatmul.mubr.bf16.gmra.mrb[0].mxu0 %v1521
      %v2069 = vpop.f32.mrb[0].mxu0
      %v2070 = vadd.f32 %v1598, %v2069
      %v2071 = vpop.f32.mrb[0].mxu0
      %v2072 = vadd.f32 %v1602, %v2071
      %v2073 = vpop.f32.mrb[0].mxu0
      %v2074 = vadd.f32 %v1598, %v2073
      %v2075 = vpop.f32.mrb[0].mxu0
      %v2076 = vadd.f32 %v1602, %v2075
      %2077 = vmatprep.mubr.bf16.mxu0 0
      %2078 = vmatmul.mubr.bf16.gmra.mrb[0].mxu0 %v1522
      %v2079 = vpop.f32.mrb[0].mxu0
      %v2080 = vadd.f32 %v1598, %v2079
      %v2081 = vpop.f32.mrb[0].mxu0
      %v2082 = vadd.f32 %v1602, %v2081
      %v2083 = vpop.f32.mrb[0].mxu0
      %v2084 = vadd.f32 %v1598, %v2083
      %v2085 = vpop.f32.mrb[0].mxu0
      %v2086 = vadd.f32 %v1602, %v2085
      %2087 = vmatprep.mubr.bf16.mxu0 0
      %2088 = vmatmul.mubr.bf16.gmra.mrb[0].mxu0 %v1523
      %v2089 = vpop.f32.mrb[0].mxu0
      %v2090 = vadd.f32 %v1598, %v2089
      %v2091 = vpop.f32.mrb[0].mxu0
      %v2092 = vadd.f32 %v1602, %v2091
      %v2093 = vpop.f32.mrb[0].mxu0
      %v2094 = vadd.f32 %v1598, %v2093
      %v2095 = vpop.f32.mrb[0].mxu0
      %v2096 = vadd.f32 %v1602, %v2095
      %2097 = vmatprep.mubr.bf16.mxu0 0
      %2098 = vmatmul.mubr.bf16.gmra.mrb[0].mxu0 %v1524
      %v2099 = vpop.f32.mrb[0].mxu0
      %v2100 = vadd.f32 %v1598, %v2099
      %v2101 = vpop.f32.mrb[0].mxu0
      %v2102 = vadd.f32 %v1602, %v2101
      %v2103 = vpop.f32.mrb[0].mxu0
      %v2104 = vadd.f32 %v1598, %v2103
      %v2105 = vpop.f32.mrb[0].mxu0
      %v2106 = vadd.f32 %v1602, %v2105
      %2107 = vmatprep.mubr.bf16.mxu0 0
      %2108 = vmatmul.mubr.bf16.gmra.mrb[0].mxu0 %v1525
      %v2109 = vpop.f32.mrb[0].mxu0
      %v2110 = vadd.f32 %v1598, %v2109
      %v2111 = vpop.f32.mrb[0].mxu0
      %v2112 = vadd.f32 %v1602, %v2111
      %v2113 = vpop.f32.mrb[0].mxu0
      %v2114 = vadd.f32 %v1598, %v2113
      %v2115 = vpop.f32.mrb[0].mxu0
      %v2116 = vadd.f32 %v1602, %v2115
      %2117 = vmatprep.mubr.bf16.mxu0 0
      %2118 = vmatmul.mubr.bf16.gmra.mrb[0].mxu0 %v1526
      %v2119 = vpop.f32.mrb[0].mxu0
      %v2120 = vadd.f32 %v1598, %v2119
      %v2121 = vpop.f32.mrb[0].mxu0
      %v2122 = vadd.f32 %v1602, %v2121
      %v2123 = vpop.f32.mrb[0].mxu0
      %v2124 = vadd.f32 %v1598, %v2123
      %v2125 = vpop.f32.mrb[0].mxu0
      %v2126 = vadd.f32 %v1602, %v2125
      %2127 = vmatprep.mubr.bf16.mxu0 0
      %2128 = vmatmul.mubr.bf16.gmra.mrb[0].mxu0 %v1527
      %v2129 = vpop.f32.mrb[0].mxu0
      %v2130 = vadd.f32 %v1598, %v2129
      %v2131 = vpop.f32.mrb[0].mxu0
      %v2132 = vadd.f32 %v1602, %v2131
      %v2133 = vpop.f32.mrb[0].mxu0
      %v2134 = vadd.f32 %v1598, %v2133
      %v2135 = vpop.f32.mrb[0].mxu0
      %v2136 = vadd.f32 %v1602, %v2135
      %2137 = vmatprep.mubr.bf16.mxu0 0
      %2138 = vmatmul.mubr.bf16.gmra.mrb[0].mxu0 %v1528
      %v2139 = vpop.f32.mrb[0].mxu0
      %v2140 = vadd.f32 %v1598, %v2139
      %v2141 = vpop.f32.mrb[0].mxu0
      %v2142 = vadd.f32 %v1602, %v2141
      %v2143 = vpop.f32.mrb[0].mxu0
      %v2144 = vadd.f32 %v1598, %v2143
      %v2145 = vpop.f32.mrb[0].mxu0
      %v2146 = vadd.f32 %v1602, %v2145
      %2147 = vdwg.mxu0
      %2148 = vmatprep.subr.bf16.mxu0 %v1830
      %2149 = vmatpush1.bf16.msra.mxu0 %v1829
      %2150 = vmatprep.subr.bf16.mxu0 %v1838
      %2151 = vmatpush1.bf16.msra.mxu0 %v1837
      %2152 = vmatprep.subr.bf16.mxu0 %v1846
      %2153 = vmatpush1.bf16.msra.mxu0 %v1845
      %2154 = vmatprep.subr.bf16.mxu0 %v1854
      %2155 = vmatpush1.bf16.msra.mxu0 %v1853
      %2156 = vmatprep.subr.bf16.mxu0 %v1862
      %2157 = vmatpush1.bf16.msra.mxu0 %v1861
      %2158 = vmatprep.subr.bf16.mxu0 %v1870
      %2159 = vmatpush1.bf16.msra.mxu0 %v1869
      %2160 = vmatprep.subr.bf16.mxu0 %v1878
      %2161 = vmatpush1.bf16.msra.mxu0 %v1877
      %2162 = vmatprep.subr.bf16.mxu0 %v1886
      %2163 = vmatpush1.bf16.msra.mxu0 %v1885
      %2164 = vmatprep.subr.bf16.mxu0 0
      %2165 = vmatpush1.bf16.msra.mxu0 0
      %2166 = vmatprep.subr.bf16.mxu0 0
      %2167 = vmatpush1.bf16.msra.mxu0 0
      %2168 = vmatprep.subr.bf16.mxu0 0
      %2169 = vmatpush1.bf16.msra.mxu0 0
      %2170 = vmatprep.subr.bf16.mxu0 0
      %2171 = vmatpush1.bf16.msra.mxu0 0
      %2172 = vmatprep.subr.bf16.mxu0 0
      %2173 = vmatpush1.bf16.msra.mxu0 0
      %2174 = vmatprep.subr.bf16.mxu0 0
      %2175 = vmatpush1.bf16.msra.mxu0 0
      %2176 = vmatprep.subr.bf16.mxu0 0
      %2177 = vmatpush1.bf16.msra.mxu0 0
      %2178 = vmatprep.subr.bf16.mxu0 0
      %2179 = vmatpush1.bf16.msra.mxu0 0
      %2180 = vmatprep.mubr.bf16.mxu0 0
      %2181 = vmatmul.mubr.bf16.gmra.mrb[0].mxu0 %v1513
      %v2182 = vpop.f32.mrb[0].mxu0
      %v2183 = vadd.f32 %v1606, %v2182
      %v2184 = vpop.f32.mrb[0].mxu0
      %v2185 = vadd.f32 %v1610, %v2184
      %v2186 = vpop.f32.mrb[0].mxu0
      %v2187 = vadd.f32 %v1606, %v2186
      %v2188 = vpop.f32.mrb[0].mxu0
      %v2189 = vadd.f32 %v1610, %v2188
      %2190 = vmatprep.mubr.bf16.mxu0 0
      %2191 = vmatmul.mubr.bf16.gmra.mrb[0].mxu0 %v1514
      %v2192 = vpop.f32.mrb[0].mxu0
      %v2193 = vadd.f32 %v1606, %v2192
      %v2194 = vpop.f32.mrb[0].mxu0
      %v2195 = vadd.f32 %v1610, %v2194
      %v2196 = vpop.f32.mrb[0].mxu0
      %v2197 = vadd.f32 %v1606, %v2196
      %v2198 = vpop.f32.mrb[0].mxu0
      %v2199 = vadd.f32 %v1610, %v2198
      %2200 = vmatprep.mubr.bf16.mxu0 0
      %2201 = vmatmul.mubr.bf16.gmra.mrb[0].mxu0 %v1515
      %v2202 = vpop.f32.mrb[0].mxu0
      %v2203 = vadd.f32 %v1606, %v2202
      %v2204 = vpop.f32.mrb[0].mxu0
      %v2205 = vadd.f32 %v1610, %v2204
      %v2206 = vpop.f32.mrb[0].mxu0
      %v2207 = vadd.f32 %v1606, %v2206
      %v2208 = vpop.f32.mrb[0].mxu0
      %v2209 = vadd.f32 %v1610, %v2208
      %2210 = vmatprep.mubr.bf16.mxu0 0
      %2211 = vmatmul.mubr.bf16.gmra.mrb[0].mxu0 %v1516
      %v2212 = vpop.f32.mrb[0].mxu0
      %v2213 = vadd.f32 %v1606, %v2212
      %v2214 = vpop.f32.mrb[0].mxu0
      %v2215 = vadd.f32 %v1610, %v2214
      %v2216 = vpop.f32.mrb[0].mxu0
      %v2217 = vadd.f32 %v1606, %v2216
      %v2218 = vpop.f32.mrb[0].mxu0
      %v2219 = vadd.f32 %v1610, %v2218
      %2220 = vmatprep.mubr.bf16.mxu0 0
      %2221 = vmatmul.mubr.bf16.gmra.mrb[0].mxu0 %v1517
      %v2222 = vpop.f32.mrb[0].mxu0
      %v2223 = vadd.f32 %v1606, %v2222
      %v2224 = vpop.f32.mrb[0].mxu0
      %v2225 = vadd.f32 %v1610, %v2224
      %v2226 = vpop.f32.mrb[0].mxu0
      %v2227 = vadd.f32 %v1606, %v2226
      %v2228 = vpop.f32.mrb[0].mxu0
      %v2229 = vadd.f32 %v1610, %v2228
      %2230 = vmatprep.mubr.bf16.mxu0 0
      %2231 = vmatmul.mubr.bf16.gmra.mrb[0].mxu0 %v1518
      %v2232 = vpop.f32.mrb[0].mxu0
      %v2233 = vadd.f32 %v1606, %v2232
      %v2234 = vpop.f32.mrb[0].mxu0
      %v2235 = vadd.f32 %v1610, %v2234
      %v2236 = vpop.f32.mrb[0].mxu0
      %v2237 = vadd.f32 %v1606, %v2236
      %v2238 = vpop.f32.mrb[0].mxu0
      %v2239 = vadd.f32 %v1610, %v2238
      %2240 = vmatprep.mubr.bf16.mxu0 0
      %2241 = vmatmul.mubr.bf16.gmra.mrb[0].mxu0 %v1519
      %v2242 = vpop.f32.mrb[0].mxu0
      %v2243 = vadd.f32 %v1606, %v2242
      %v2244 = vpop.f32.mrb[0].mxu0
      %v2245 = vadd.f32 %v1610, %v2244
      %v2246 = vpop.f32.mrb[0].mxu0
      %v2247 = vadd.f32 %v1606, %v2246
      %v2248 = vpop.f32.mrb[0].mxu0
      %v2249 = vadd.f32 %v1610, %v2248
      %2250 = vmatprep.mubr.bf16.mxu0 0
      %2251 = vmatmul.mubr.bf16.gmra.mrb[0].mxu0 %v1520
      %v2252 = vpop.f32.mrb[0].mxu0
      %v2253 = vadd.f32 %v1606, %v2252
      %v2254 = vpop.f32.mrb[0].mxu0
      %v2255 = vadd.f32 %v1610, %v2254
      %v2256 = vpop.f32.mrb[0].mxu0
      %v2257 = vadd.f32 %v1606, %v2256
      %v2258 = vpop.f32.mrb[0].mxu0
      %v2259 = vadd.f32 %v1610, %v2258
      %2260 = vmatprep.mubr.bf16.mxu0 0
      %2261 = vmatmul.mubr.bf16.gmra.mrb[0].mxu0 %v1521
      %v2262 = vpop.f32.mrb[0].mxu0
      %v2263 = vadd.f32 %v1606, %v2262
      %v2264 = vpop.f32.mrb[0].mxu0
      %v2265 = vadd.f32 %v1610, %v2264
      %v2266 = vpop.f32.mrb[0].mxu0
      %v2267 = vadd.f32 %v1606, %v2266
      %v2268 = vpop.f32.mrb[0].mxu0
      %v2269 = vadd.f32 %v1610, %v2268
      %2270 = vmatprep.mubr.bf16.mxu0 0
      %2271 = vmatmul.mubr.bf16.gmra.mrb[0].mxu0 %v1522
      %v2272 = vpop.f32.mrb[0].mxu0
      %v2273 = vadd.f32 %v1606, %v2272
      %v2274 = vpop.f32.mrb[0].mxu0
      %v2275 = vadd.f32 %v1610, %v2274
      %v2276 = vpop.f32.mrb[0].mxu0
      %v2277 = vadd.f32 %v1606, %v2276
      %v2278 = vpop.f32.mrb[0].mxu0
      %v2279 = vadd.f32 %v1610, %v2278
      %2280 = vmatprep.mubr.bf16.mxu0 0
      %2281 = vmatmul.mubr.bf16.gmra.mrb[0].mxu0 %v1523
      %v2282 = vpop.f32.mrb[0].mxu0
      %v2283 = vadd.f32 %v1606, %v2282
      %v2284 = vpop.f32.mrb[0].mxu0
      %v2285 = vadd.f32 %v1610, %v2284
      %v2286 = vpop.f32.mrb[0].mxu0
      %v2287 = vadd.f32 %v1606, %v2286
      %v2288 = vpop.f32.mrb[0].mxu0
      %v2289 = vadd.f32 %v1610, %v2288
      %2290 = vmatprep.mubr.bf16.mxu0 0
      %2291 = vmatmul.mubr.bf16.gmra.mrb[0].mxu0 %v1524
      %v2292 = vpop.f32.mrb[0].mxu0
      %v2293 = vadd.f32 %v1606, %v2292
      %v2294 = vpop.f32.mrb[0].mxu0
      %v2295 = vadd.f32 %v1610, %v2294
      %v2296 = vpop.f32.mrb[0].mxu0
      %v2297 = vadd.f32 %v1606, %v2296
      %v2298 = vpop.f32.mrb[0].mxu0
      %v2299 = vadd.f32 %v1610, %v2298
      %2300 = vmatprep.mubr.bf16.mxu0 0
      %2301 = vmatmul.mubr.bf16.gmra.mrb[0].mxu0 %v1525
      %v2302 = vpop.f32.mrb[0].mxu0
      %v2303 = vadd.f32 %v1606, %v2302
      %v2304 = vpop.f32.mrb[0].mxu0
      %v2305 = vadd.f32 %v1610, %v2304
      %v2306 = vpop.f32.mrb[0].mxu0
      %v2307 = vadd.f32 %v1606, %v2306
      %v2308 = vpop.f32.mrb[0].mxu0
      %v2309 = vadd.f32 %v1610, %v2308
      %2310 = vmatprep.mubr.bf16.mxu0 0
      %2311 = vmatmul.mubr.bf16.gmra.mrb[0].mxu0 %v1526
      %v2312 = vpop.f32.mrb[0].mxu0
      %v2313 = vadd.f32 %v1606, %v2312
      %v2314 = vpop.f32.mrb[0].mxu0
      %v2315 = vadd.f32 %v1610, %v2314
      %v2316 = vpop.f32.mrb[0].mxu0
      %v2317 = vadd.f32 %v1606, %v2316
      %v2318 = vpop.f32.mrb[0].mxu0
      %v2319 = vadd.f32 %v1610, %v2318
      %2320 = vmatprep.mubr.bf16.mxu0 0
      %2321 = vmatmul.mubr.bf16.gmra.mrb[0].mxu0 %v1527
      %v2322 = vpop.f32.mrb[0].mxu0
      %v2323 = vadd.f32 %v1606, %v2322
      %v2324 = vpop.f32.mrb[0].mxu0
      %v2325 = vadd.f32 %v1610, %v2324
      %v2326 = vpop.f32.mrb[0].mxu0
      %v2327 = vadd.f32 %v1606, %v2326
      %v2328 = vpop.f32.mrb[0].mxu0
      %v2329 = vadd.f32 %v1610, %v2328
      %2330 = vmatprep.mubr.bf16.mxu0 0
      %2331 = vmatmul.mubr.bf16.gmra.mrb[0].mxu0 %v1528
      %v2332 = vpop.f32.mrb[0].mxu0
      %v2333 = vadd.f32 %v1606, %v2332
      %v2334 = vpop.f32.mrb[0].mxu0
      %v2335 = vadd.f32 %v1610, %v2334
      %v2336 = vpop.f32.mrb[0].mxu0
      %v2337 = vadd.f32 %v1606, %v2336
      %v2338 = vpop.f32.mrb[0].mxu0
      %v2339 = vadd.f32 %v1610, %v2338
      %2340 = vdwg.mxu0
      %2341 = vmatprep.subr.bf16.mxu0 %v1832
      %2342 = vmatpush1.bf16.msra.mxu0 %v1831
      %2343 = vmatprep.subr.bf16.mxu0 %v1840
      %2344 = vmatpush1.bf16.msra.mxu0 %v1839
      %2345 = vmatprep.subr.bf16.mxu0 %v1848
      %2346 = vmatpush1.bf16.msra.mxu0 %v1847
      %2347 = vmatprep.subr.bf16.mxu0 %v1856
      %2348 = vmatpush1.bf16.msra.mxu0 %v1855
      %2349 = vmatprep.subr.bf16.mxu0 %v1864
      %2350 = vmatpush1.bf16.msra.mxu0 %v1863
      %2351 = vmatprep.subr.bf16.mxu0 %v1872
      %2352 = vmatpush1.bf16.msra.mxu0 %v1871
      %2353 = vmatprep.subr.bf16.mxu0 %v1880
      %2354 = vmatpush1.bf16.msra.mxu0 %v1879
      %2355 = vmatprep.subr.bf16.mxu0 %v1888
      %2356 = vmatpush1.bf16.msra.mxu0 %v1887
      %2357 = vmatprep.subr.bf16.mxu0 0
      %2358 = vmatpush1.bf16.msra.mxu0 0
      %2359 = vmatprep.subr.bf16.mxu0 0
      %2360 = vmatpush1.bf16.msra.mxu0 0
      %2361 = vmatprep.subr.bf16.mxu0 0
      %2362 = vmatpush1.bf16.msra.mxu0 0
      %2363 = vmatprep.subr.bf16.mxu0 0
      %2364 = vmatpush1.bf16.msra.mxu0 0
      %2365 = vmatprep.subr.bf16.mxu0 0
      %2366 = vmatpush1.bf16.msra.mxu0 0
      %2367 = vmatprep.subr.bf16.mxu0 0
      %2368 = vmatpush1.bf16.msra.mxu0 0
      %2369 = vmatprep.subr.bf16.mxu0 0
      %2370 = vmatpush1.bf16.msra.mxu0 0
      %2371 = vmatprep.subr.bf16.mxu0 0
      %2372 = vmatpush1.bf16.msra.mxu0 0
      %2373 = vmatprep.mubr.bf16.mxu0 0
      %2374 = vmatmul.mubr.bf16.gmra.mrb[0].mxu0 %v1513
      %v2375 = vpop.f32.mrb[0].mxu0
      %v2376 = vadd.f32 %v1614, %v2375
      %v2377 = vpop.f32.mrb[0].mxu0
      %v2378 = vadd.f32 %v1618, %v2377
      %v2379 = vpop.f32.mrb[0].mxu0
      %v2380 = vadd.f32 %v1614, %v2379
      %v2381 = vpop.f32.mrb[0].mxu0
      %v2382 = vadd.f32 %v1618, %v2381
      %2383 = vmatprep.mubr.bf16.mxu0 0
      %2384 = vmatmul.mubr.bf16.gmra.mrb[0].mxu0 %v1514
      %v2385 = vpop.f32.mrb[0].mxu0
      %v2386 = vadd.f32 %v1614, %v2385
      %v2387 = vpop.f32.mrb[0].mxu0
      %v2388 = vadd.f32 %v1618, %v2387
      %v2389 = vpop.f32.mrb[0].mxu0
      %v2390 = vadd.f32 %v1614, %v2389
      %v2391 = vpop.f32.mrb[0].mxu0
      %v2392 = vadd.f32 %v1618, %v2391
      %2393 = vmatprep.mubr.bf16.mxu0 0
      %2394 = vmatmul.mubr.bf16.gmra.mrb[0].mxu0 %v1515
      %v2395 = vpop.f32.mrb[0].mxu0
      %v2396 = vadd.f32 %v1614, %v2395
      %v2397 = vpop.f32.mrb[0].mxu0
      %v2398 = vadd.f32 %v1618, %v2397
      %v2399 = vpop.f32.mrb[0].mxu0
      %v2400 = vadd.f32 %v1614, %v2399
      %v2401 = vpop.f32.mrb[0].mxu0
      %v2402 = vadd.f32 %v1618, %v2401
      %2403 = vmatprep.mubr.bf16.mxu0 0
      %2404 = vmatmul.mubr.bf16.gmra.mrb[0].mxu0 %v1516
      %v2405 = vpop.f32.mrb[0].mxu0
      %v2406 = vadd.f32 %v1614, %v2405
      %v2407 = vpop.f32.mrb[0].mxu0
      %v2408 = vadd.f32 %v1618, %v2407
      %v2409 = vpop.f32.mrb[0].mxu0
      %v2410 = vadd.f32 %v1614, %v2409
      %v2411 = vpop.f32.mrb[0].mxu0
      %v2412 = vadd.f32 %v1618, %v2411
      %2413 = vmatprep.mubr.bf16.mxu0 0
      %2414 = vmatmul.mubr.bf16.gmra.mrb[0].mxu0 %v1517
      %v2415 = vpop.f32.mrb[0].mxu0
      %v2416 = vadd.f32 %v1614, %v2415
      %v2417 = vpop.f32.mrb[0].mxu0
      %v2418 = vadd.f32 %v1618, %v2417
      %v2419 = vpop.f32.mrb[0].mxu0
      %v2420 = vadd.f32 %v1614, %v2419
      %v2421 = vpop.f32.mrb[0].mxu0
      %v2422 = vadd.f32 %v1618, %v2421
      %2423 = vmatprep.mubr.bf16.mxu0 0
      %2424 = vmatmul.mubr.bf16.gmra.mrb[0].mxu0 %v1518
      %v2425 = vpop.f32.mrb[0].mxu0
      %v2426 = vadd.f32 %v1614, %v2425
      %v2427 = vpop.f32.mrb[0].mxu0
      %v2428 = vadd.f32 %v1618, %v2427
      %v2429 = vpop.f32.mrb[0].mxu0
      %v2430 = vadd.f32 %v1614, %v2429
      %v2431 = vpop.f32.mrb[0].mxu0
      %v2432 = vadd.f32 %v1618, %v2431
      %2433 = vmatprep.mubr.bf16.mxu0 0
      %2434 = vmatmul.mubr.bf16.gmra.mrb[0].mxu0 %v1519
      %v2435 = vpop.f32.mrb[0].mxu0
      %v2436 = vadd.f32 %v1614, %v2435
      %v2437 = vpop.f32.mrb[0].mxu0
      %v2438 = vadd.f32 %v1618, %v2437
      %v2439 = vpop.f32.mrb[0].mxu0
      %v2440 = vadd.f32 %v1614, %v2439
      %v2441 = vpop.f32.mrb[0].mxu0
      %v2442 = vadd.f32 %v1618, %v2441
      %2443 = vmatprep.mubr.bf16.mxu0 0
      %2444 = vmatmul.mubr.bf16.gmra.mrb[0].mxu0 %v1520
      %v2445 = vpop.f32.mrb[0].mxu0
      %v2446 = vadd.f32 %v1614, %v2445
      %v2447 = vpop.f32.mrb[0].mxu0
      %v2448 = vadd.f32 %v1618, %v2447
      %v2449 = vpop.f32.mrb[0].mxu0
      %v2450 = vadd.f32 %v1614, %v2449
      %v2451 = vpop.f32.mrb[0].mxu0
      %v2452 = vadd.f32 %v1618, %v2451
      %2453 = vmatprep.mubr.bf16.mxu0 0
      %2454 = vmatmul.mubr.bf16.gmra.mrb[0].mxu0 %v1521
      %v2455 = vpop.f32.mrb[0].mxu0
      %v2456 = vadd.f32 %v1614, %v2455
      %v2457 = vpop.f32.mrb[0].mxu0
      %v2458 = vadd.f32 %v1618, %v2457
      %v2459 = vpop.f32.mrb[0].mxu0
      %v2460 = vadd.f32 %v1614, %v2459
      %v2461 = vpop.f32.mrb[0].mxu0
      %v2462 = vadd.f32 %v1618, %v2461
      %2463 = vmatprep.mubr.bf16.mxu0 0
      %2464 = vmatmul.mubr.bf16.gmra.mrb[0].mxu0 %v1522
      %v2465 = vpop.f32.mrb[0].mxu0
      %v2466 = vadd.f32 %v1614, %v2465
      %v2467 = vpop.f32.mrb[0].mxu0
      %v2468 = vadd.f32 %v1618, %v2467
      %v2469 = vpop.f32.mrb[0].mxu0
      %v2470 = vadd.f32 %v1614, %v2469
      %v2471 = vpop.f32.mrb[0].mxu0
      %v2472 = vadd.f32 %v1618, %v2471
      %2473 = vmatprep.mubr.bf16.mxu0 0
      %2474 = vmatmul.mubr.bf16.gmra.mrb[0].mxu0 %v1523
      %v2475 = vpop.f32.mrb[0].mxu0
      %v2476 = vadd.f32 %v1614, %v2475
      %v2477 = vpop.f32.mrb[0].mxu0
      %v2478 = vadd.f32 %v1618, %v2477
      %v2479 = vpop.f32.mrb[0].mxu0
      %v2480 = vadd.f32 %v1614, %v2479
      %v2481 = vpop.f32.mrb[0].mxu0
      %v2482 = vadd.f32 %v1618, %v2481
      %2483 = vmatprep.mubr.bf16.mxu0 0
      %2484 = vmatmul.mubr.bf16.gmra.mrb[0].mxu0 %v1524
      %v2485 = vpop.f32.mrb[0].mxu0
      %v2486 = vadd.f32 %v1614, %v2485
      %v2487 = vpop.f32.mrb[0].mxu0
      %v2488 = vadd.f32 %v1618, %v2487
      %v2489 = vpop.f32.mrb[0].mxu0
      %v2490 = vadd.f32 %v1614, %v2489
      %v2491 = vpop.f32.mrb[0].mxu0
      %v2492 = vadd.f32 %v1618, %v2491
      %2493 = vmatprep.mubr.bf16.mxu0 0
      %2494 = vmatmul.mubr.bf16.gmra.mrb[0].mxu0 %v1525
      %v2495 = vpop.f32.mrb[0].mxu0
      %v2496 = vadd.f32 %v1614, %v2495
      %v2497 = vpop.f32.mrb[0].mxu0
      %v2498 = vadd.f32 %v1618, %v2497
      %v2499 = vpop.f32.mrb[0].mxu0
      %v2500 = vadd.f32 %v1614, %v2499
      %v2501 = vpop.f32.mrb[0].mxu0
      %v2502 = vadd.f32 %v1618, %v2501
      %2503 = vmatprep.mubr.bf16.mxu0 0
      %2504 = vmatmul.mubr.bf16.gmra.mrb[0].mxu0 %v1526
      %v2505 = vpop.f32.mrb[0].mxu0
      %v2506 = vadd.f32 %v1614, %v2505
      %v2507 = vpop.f32.mrb[0].mxu0
      %v2508 = vadd.f32 %v1618, %v2507
      %v2509 = vpop.f32.mrb[0].mxu0
      %v2510 = vadd.f32 %v1614, %v2509
      %v2511 = vpop.f32.mrb[0].mxu0
      %v2512 = vadd.f32 %v1618, %v2511
      %2513 = vmatprep.mubr.bf16.mxu0 0
      %2514 = vmatmul.mubr.bf16.gmra.mrb[0].mxu0 %v1527
      %v2515 = vpop.f32.mrb[0].mxu0
      %v2516 = vadd.f32 %v1614, %v2515
      %v2517 = vpop.f32.mrb[0].mxu0
      %v2518 = vadd.f32 %v1618, %v2517
      %v2519 = vpop.f32.mrb[0].mxu0
      %v2520 = vadd.f32 %v1614, %v2519
      %v2521 = vpop.f32.mrb[0].mxu0
      %v2522 = vadd.f32 %v1618, %v2521
      %2523 = vmatprep.mubr.bf16.mxu0 0
      %2524 = vmatmul.mubr.bf16.gmra.mrb[0].mxu0 %v1528
      %v2525 = vpop.f32.mrb[0].mxu0
      %v2526 = vadd.f32 %v1614, %v2525
      %v2527 = vpop.f32.mrb[0].mxu0
      %v2528 = vadd.f32 %v1618, %v2527
      %v2529 = vpop.f32.mrb[0].mxu0
      %v2530 = vadd.f32 %v1614, %v2529
      %v2531 = vpop.f32.mrb[0].mxu0
      %v2532 = vadd.f32 %v1618, %v2531
      %2533 = vdwg.mxu0
      %2534 = vmatprep.subr.bf16.mxu0 %v1834
      %2535 = vmatpush1.bf16.msra.mxu0 %v1833
      %2536 = vmatprep.subr.bf16.mxu0 %v1842
      %2537 = vmatpush1.bf16.msra.mxu0 %v1841
      %2538 = vmatprep.subr.bf16.mxu0 %v1850
      %2539 = vmatpush1.bf16.msra.mxu0 %v1849
      %2540 = vmatprep.subr.bf16.mxu0 %v1858
      %2541 = vmatpush1.bf16.msra.mxu0 %v1857
      %2542 = vmatprep.subr.bf16.mxu0 %v1866
      %2543 = vmatpush1.bf16.msra.mxu0 %v1865
      %2544 = vmatprep.subr.bf16.mxu0 %v1874
      %2545 = vmatpush1.bf16.msra.mxu0 %v1873
      %2546 = vmatprep.subr.bf16.mxu0 %v1882
      %2547 = vmatpush1.bf16.msra.mxu0 %v1881
      %2548 = vmatprep.subr.bf16.mxu0 %v1890
      %2549 = vmatpush1.bf16.msra.mxu0 %v1889
      %2550 = vmatprep.subr.bf16.mxu0 0
      %2551 = vmatpush1.bf16.msra.mxu0 0
      %2552 = vmatprep.subr.bf16.mxu0 0
      %2553 = vmatpush1.bf16.msra.mxu0 0
      %2554 = vmatprep.subr.bf16.mxu0 0
      %2555 = vmatpush1.bf16.msra.mxu0 0
      %2556 = vmatprep.subr.bf16.mxu0 0
      %2557 = vmatpush1.bf16.msra.mxu0 0
      %2558 = vmatprep.subr.bf16.mxu0 0
      %2559 = vmatpush1.bf16.msra.mxu0 0
      %2560 = vmatprep.subr.bf16.mxu0 0
      %2561 = vmatpush1.bf16.msra.mxu0 0
      %2562 = vmatprep.subr.bf16.mxu0 0
      %2563 = vmatpush1.bf16.msra.mxu0 0
      %2564 = vmatprep.subr.bf16.mxu0 0
      %2565 = vmatpush1.bf16.msra.mxu0 0
      %2566 = vmatprep.mubr.bf16.mxu0 0
      %2567 = vmatmul.mubr.bf16.gmra.mrb[0].mxu0 %v1513
      %v2568 = vpop.f32.mrb[0].mxu0
      %v2569 = vadd.f32 %v1622, %v2568
      %v2570 = vpop.f32.mrb[0].mxu0
      %v2571 = vadd.f32 %v1626, %v2570
      %v2572 = vpop.f32.mrb[0].mxu0
      %v2573 = vadd.f32 %v1622, %v2572
      %v2574 = vpop.f32.mrb[0].mxu0
      %v2575 = vadd.f32 %v1626, %v2574
      %2576 = vmatprep.mubr.bf16.mxu0 0
      %2577 = vmatmul.mubr.bf16.gmra.mrb[0].mxu0 %v1514
      %v2578 = vpop.f32.mrb[0].mxu0
      %v2579 = vadd.f32 %v1622, %v2578
      %v2580 = vpop.f32.mrb[0].mxu0
      %v2581 = vadd.f32 %v1626, %v2580
      %v2582 = vpop.f32.mrb[0].mxu0
      %v2583 = vadd.f32 %v1622, %v2582
      %v2584 = vpop.f32.mrb[0].mxu0
      %v2585 = vadd.f32 %v1626, %v2584
      %2586 = vmatprep.mubr.bf16.mxu0 0
      %2587 = vmatmul.mubr.bf16.gmra.mrb[0].mxu0 %v1515
      %v2588 = vpop.f32.mrb[0].mxu0
      %v2589 = vadd.f32 %v1622, %v2588
      %v2590 = vpop.f32.mrb[0].mxu0
      %v2591 = vadd.f32 %v1626, %v2590
      %v2592 = vpop.f32.mrb[0].mxu0
      %v2593 = vadd.f32 %v1622, %v2592
      %v2594 = vpop.f32.mrb[0].mxu0
      %v2595 = vadd.f32 %v1626, %v2594
      %2596 = vmatprep.mubr.bf16.mxu0 0
      %2597 = vmatmul.mubr.bf16.gmra.mrb[0].mxu0 %v1516
      %v2598 = vpop.f32.mrb[0].mxu0
      %v2599 = vadd.f32 %v1622, %v2598
      %v2600 = vpop.f32.mrb[0].mxu0
      %v2601 = vadd.f32 %v1626, %v2600
      %v2602 = vpop.f32.mrb[0].mxu0
      %v2603 = vadd.f32 %v1622, %v2602
      %v2604 = vpop.f32.mrb[0].mxu0
      %v2605 = vadd.f32 %v1626, %v2604
      %2606 = vmatprep.mubr.bf16.mxu0 0
      %2607 = vmatmul.mubr.bf16.gmra.mrb[0].mxu0 %v1517
      %v2608 = vpop.f32.mrb[0].mxu0
      %v2609 = vadd.f32 %v1622, %v2608
      %v2610 = vpop.f32.mrb[0].mxu0
      %v2611 = vadd.f32 %v1626, %v2610
      %v2612 = vpop.f32.mrb[0].mxu0
      %v2613 = vadd.f32 %v1622, %v2612
      %v2614 = vpop.f32.mrb[0].mxu0
      %v2615 = vadd.f32 %v1626, %v2614
      %2616 = vmatprep.mubr.bf16.mxu0 0
      %2617 = vmatmul.mubr.bf16.gmra.mrb[0].mxu0 %v1518
      %v2618 = vpop.f32.mrb[0].mxu0
      %v2619 = vadd.f32 %v1622, %v2618
      %v2620 = vpop.f32.mrb[0].mxu0
      %v2621 = vadd.f32 %v1626, %v2620
      %v2622 = vpop.f32.mrb[0].mxu0
      %v2623 = vadd.f32 %v1622, %v2622
      %v2624 = vpop.f32.mrb[0].mxu0
      %v2625 = vadd.f32 %v1626, %v2624
      %2626 = vmatprep.mubr.bf16.mxu0 0
      %2627 = vmatmul.mubr.bf16.gmra.mrb[0].mxu0 %v1519
      %v2628 = vpop.f32.mrb[0].mxu0
      %v2629 = vadd.f32 %v1622, %v2628
      %v2630 = vpop.f32.mrb[0].mxu0
      %v2631 = vadd.f32 %v1626, %v2630
      %v2632 = vpop.f32.mrb[0].mxu0
      %v2633 = vadd.f32 %v1622, %v2632
      %v2634 = vpop.f32.mrb[0].mxu0
      %v2635 = vadd.f32 %v1626, %v2634
      %2636 = vmatprep.mubr.bf16.mxu0 0
      %2637 = vmatmul.mubr.bf16.gmra.mrb[0].mxu0 %v1520
      %v2638 = vpop.f32.mrb[0].mxu0
      %v2639 = vadd.f32 %v1622, %v2638
      %v2640 = vpop.f32.mrb[0].mxu0
      %v2641 = vadd.f32 %v1626, %v2640
      %v2642 = vpop.f32.mrb[0].mxu0
      %v2643 = vadd.f32 %v1622, %v2642
      %v2644 = vpop.f32.mrb[0].mxu0
      %v2645 = vadd.f32 %v1626, %v2644
      %2646 = vmatprep.mubr.bf16.mxu0 0
      %2647 = vmatmul.mubr.bf16.gmra.mrb[0].mxu0 %v1521
      %v2648 = vpop.f32.mrb[0].mxu0
      %v2649 = vadd.f32 %v1622, %v2648
      %v2650 = vpop.f32.mrb[0].mxu0
      %v2651 = vadd.f32 %v1626, %v2650
      %v2652 = vpop.f32.mrb[0].mxu0
      %v2653 = vadd.f32 %v1622, %v2652
      %v2654 = vpop.f32.mrb[0].mxu0
      %v2655 = vadd.f32 %v1626, %v2654
      %2656 = vmatprep.mubr.bf16.mxu0 0
      %2657 = vmatmul.mubr.bf16.gmra.mrb[0].mxu0 %v1522
      %v2658 = vpop.f32.mrb[0].mxu0
      %v2659 = vadd.f32 %v1622, %v2658
      %v2660 = vpop.f32.mrb[0].mxu0
      %v2661 = vadd.f32 %v1626, %v2660
      %v2662 = vpop.f32.mrb[0].mxu0
      %v2663 = vadd.f32 %v1622, %v2662
      %v2664 = vpop.f32.mrb[0].mxu0
      %v2665 = vadd.f32 %v1626, %v2664
      %2666 = vmatprep.mubr.bf16.mxu0 0
      %2667 = vmatmul.mubr.bf16.gmra.mrb[0].mxu0 %v1523
      %v2668 = vpop.f32.mrb[0].mxu0
      %v2669 = vadd.f32 %v1622, %v2668
      %v2670 = vpop.f32.mrb[0].mxu0
      %v2671 = vadd.f32 %v1626, %v2670
      %v2672 = vpop.f32.mrb[0].mxu0
      %v2673 = vadd.f32 %v1622, %v2672
      %v2674 = vpop.f32.mrb[0].mxu0
      %v2675 = vadd.f32 %v1626, %v2674
      %2676 = vmatprep.mubr.bf16.mxu0 0
      %2677 = vmatmul.mubr.bf16.gmra.mrb[0].mxu0 %v1524
      %v2678 = vpop.f32.mrb[0].mxu0
      %v2679 = vadd.f32 %v1622, %v2678
      %v2680 = vpop.f32.mrb[0].mxu0
      %v2681 = vadd.f32 %v1626, %v2680
      %v2682 = vpop.f32.mrb[0].mxu0
      %v2683 = vadd.f32 %v1622, %v2682
      %v2684 = vpop.f32.mrb[0].mxu0
      %v2685 = vadd.f32 %v1626, %v2684
      %2686 = vmatprep.mubr.bf16.mxu0 0
      %2687 = vmatmul.mubr.bf16.gmra.mrb[0].mxu0 %v1525
      %v2688 = vpop.f32.mrb[0].mxu0
      %v2689 = vadd.f32 %v1622, %v2688
      %v2690 = vpop.f32.mrb[0].mxu0
      %v2691 = vadd.f32 %v1626, %v2690
      %v2692 = vpop.f32.mrb[0].mxu0
      %v2693 = vadd.f32 %v1622, %v2692
      %v2694 = vpop.f32.mrb[0].mxu0
      %v2695 = vadd.f32 %v1626, %v2694
      %2696 = vmatprep.mubr.bf16.mxu0 0
      %2697 = vmatmul.mubr.bf16.gmra.mrb[0].mxu0 %v1526
      %v2698 = vpop.f32.mrb[0].mxu0
      %v2699 = vadd.f32 %v1622, %v2698
      %v2700 = vpop.f32.mrb[0].mxu0
      %v2701 = vadd.f32 %v1626, %v2700
      %v2702 = vpop.f32.mrb[0].mxu0
      %v2703 = vadd.f32 %v1622, %v2702
      %v2704 = vpop.f32.mrb[0].mxu0
      %v2705 = vadd.f32 %v1626, %v2704
      %2706 = vmatprep.mubr.bf16.mxu0 0
      %2707 = vmatmul.mubr.bf16.gmra.mrb[0].mxu0 %v1527
      %v2708 = vpop.f32.mrb[0].mxu0
      %v2709 = vadd.f32 %v1622, %v2708
      %v2710 = vpop.f32.mrb[0].mxu0
      %v2711 = vadd.f32 %v1626, %v2710
      %v2712 = vpop.f32.mrb[0].mxu0
      %v2713 = vadd.f32 %v1622, %v2712
      %v2714 = vpop.f32.mrb[0].mxu0
      %v2715 = vadd.f32 %v1626, %v2714
      %2716 = vmatprep.mubr.bf16.mxu0 0
      %2717 = vmatmul.mubr.bf16.gmra.mrb[0].mxu0 %v1528
      %v2718 = vpop.f32.mrb[0].mxu0
      %v2719 = vadd.f32 %v1622, %v2718
      %v2720 = vpop.f32.mrb[0].mxu0
      %v2721 = vadd.f32 %v1626, %v2720
      %v2722 = vpop.f32.mrb[0].mxu0
      %v2723 = vadd.f32 %v1622, %v2722
      %v2724 = vpop.f32.mrb[0].mxu0
      %v2725 = vadd.f32 %v1626, %v2724
      %2726 = vdwg.mxu0
      %v2727 = vmax.f32 %v1990, %v1994
      %v2728 = vmax.f32 %v2727, %v2000
      %v2729 = vmax.f32 %v2728, %v2004
      %v2730 = vmax.f32 %v2729, %v2010
      %v2731 = vmax.f32 %v2730, %v2014
      %v2732 = vmax.f32 %v2731, %v2020
      %v2733 = vmax.f32 %v2732, %v2024
      %v2734 = vmax.f32 %v2733, %v2030
      %v2735 = vmax.f32 %v2734, %v2034
      %v2736 = vmax.f32 %v2735, %v2040
      %v2737 = vmax.f32 %v2736, %v2044
      %v2738 = vmax.f32 %v2737, %v2050
      %v2739 = vmax.f32 %v2738, %v2054
      %v2740 = vmax.f32 %v2739, %v2060
      %v2741 = vmax.f32 %v2740, %v2064
      %v2742 = vmax.f32 %v2741, %v2070
      %v2743 = vmax.f32 %v2742, %v2074
      %v2744 = vmax.f32 %v2743, %v2080
      %v2745 = vmax.f32 %v2744, %v2084
      %v2746 = vmax.f32 %v2745, %v2090
      %v2747 = vmax.f32 %v2746, %v2094
      %v2748 = vmax.f32 %v2747, %v2100
      %v2749 = vmax.f32 %v2748, %v2104
      %v2750 = vmax.f32 %v2749, %v2110
      %v2751 = vmax.f32 %v2750, %v2114
      %v2752 = vmax.f32 %v2751, %v2120
      %v2753 = vmax.f32 %v2752, %v2124
      %v2754 = vmax.f32 %v2753, %v2130
      %v2755 = vmax.f32 %v2754, %v2134
      %v2756 = vmax.f32 %v2755, %v2140
      %v2757 = vmax.f32 %v2756, %v2144
      %v2758 = vmax.f32 %v1992, %v1996
      %v2759 = vmax.f32 %v2758, %v2002
      %v2760 = vmax.f32 %v2759, %v2006
      %v2761 = vmax.f32 %v2760, %v2012
      %v2762 = vmax.f32 %v2761, %v2016
      %v2763 = vmax.f32 %v2762, %v2022
      %v2764 = vmax.f32 %v2763, %v2026
      %v2765 = vmax.f32 %v2764, %v2032
      %v2766 = vmax.f32 %v2765, %v2036
      %v2767 = vmax.f32 %v2766, %v2042
      %v2768 = vmax.f32 %v2767, %v2046
      %v2769 = vmax.f32 %v2768, %v2052
      %v2770 = vmax.f32 %v2769, %v2056
      %v2771 = vmax.f32 %v2770, %v2062
      %v2772 = vmax.f32 %v2771, %v2066
      %v2773 = vmax.f32 %v2772, %v2072
      %v2774 = vmax.f32 %v2773, %v2076
      %v2775 = vmax.f32 %v2774, %v2082
      %v2776 = vmax.f32 %v2775, %v2086
      %v2777 = vmax.f32 %v2776, %v2092
      %v2778 = vmax.f32 %v2777, %v2096
      %v2779 = vmax.f32 %v2778, %v2102
      %v2780 = vmax.f32 %v2779, %v2106
      %v2781 = vmax.f32 %v2780, %v2112
      %v2782 = vmax.f32 %v2781, %v2116
      %v2783 = vmax.f32 %v2782, %v2122
      %v2784 = vmax.f32 %v2783, %v2126
      %v2785 = vmax.f32 %v2784, %v2132
      %v2786 = vmax.f32 %v2785, %v2136
      %v2787 = vmax.f32 %v2786, %v2142
      %v2788 = vmax.f32 %v2787, %v2146
      %v2789 = vmax.f32 %v2183, %v2187
      %v2790 = vmax.f32 %v2789, %v2193
      %v2791 = vmax.f32 %v2790, %v2197
      %v2792 = vmax.f32 %v2791, %v2203
      %v2793 = vmax.f32 %v2792, %v2207
      %v2794 = vmax.f32 %v2793, %v2213
      %v2795 = vmax.f32 %v2794, %v2217
      %v2796 = vmax.f32 %v2795, %v2223
      %v2797 = vmax.f32 %v2796, %v2227
      %v2798 = vmax.f32 %v2797, %v2233
      %v2799 = vmax.f32 %v2798, %v2237
      %v2800 = vmax.f32 %v2799, %v2243
      %v2801 = vmax.f32 %v2800, %v2247
      %v2802 = vmax.f32 %v2801, %v2253
      %v2803 = vmax.f32 %v2802, %v2257
      %v2804 = vmax.f32 %v2803, %v2263
      %v2805 = vmax.f32 %v2804, %v2267
      %v2806 = vmax.f32 %v2805, %v2273
      %v2807 = vmax.f32 %v2806, %v2277
      %v2808 = vmax.f32 %v2807, %v2283
      %v2809 = vmax.f32 %v2808, %v2287
      %v2810 = vmax.f32 %v2809, %v2293
      %v2811 = vmax.f32 %v2810, %v2297
      %v2812 = vmax.f32 %v2811, %v2303
      %v2813 = vmax.f32 %v2812, %v2307
      %v2814 = vmax.f32 %v2813, %v2313
      %v2815 = vmax.f32 %v2814, %v2317
      %v2816 = vmax.f32 %v2815, %v2323
      %v2817 = vmax.f32 %v2816, %v2327
      %v2818 = vmax.f32 %v2817, %v2333
      %v2819 = vmax.f32 %v2818, %v2337
      %v2820 = vmax.f32 %v2185, %v2189
      %v2821 = vmax.f32 %v2820, %v2195
      %v2822 = vmax.f32 %v2821, %v2199
      %v2823 = vmax.f32 %v2822, %v2205
      %v2824 = vmax.f32 %v2823, %v2209
      %v2825 = vmax.f32 %v2824, %v2215
      %v2826 = vmax.f32 %v2825, %v2219
      %v2827 = vmax.f32 %v2826, %v2225
      %v2828 = vmax.f32 %v2827, %v2229
      %v2829 = vmax.f32 %v2828, %v2235
      %v2830 = vmax.f32 %v2829, %v2239
      %v2831 = vmax.f32 %v2830, %v2245
      %v2832 = vmax.f32 %v2831, %v2249
      %v2833 = vmax.f32 %v2832, %v2255
      %v2834 = vmax.f32 %v2833, %v2259
      %v2835 = vmax.f32 %v2834, %v2265
      %v2836 = vmax.f32 %v2835, %v2269
      %v2837 = vmax.f32 %v2836, %v2275
      %v2838 = vmax.f32 %v2837, %v2279
      %v2839 = vmax.f32 %v2838, %v2285
      %v2840 = vmax.f32 %v2839, %v2289
      %v2841 = vmax.f32 %v2840, %v2295
      %v2842 = vmax.f32 %v2841, %v2299
      %v2843 = vmax.f32 %v2842, %v2305
      %v2844 = vmax.f32 %v2843, %v2309
      %v2845 = vmax.f32 %v2844, %v2315
      %v2846 = vmax.f32 %v2845, %v2319
      %v2847 = vmax.f32 %v2846, %v2325
      %v2848 = vmax.f32 %v2847, %v2329
      %v2849 = vmax.f32 %v2848, %v2335
      %v2850 = vmax.f32 %v2849, %v2339
      %v2851 = vmax.f32 %v2376, %v2380
      %v2852 = vmax.f32 %v2851, %v2386
      %v2853 = vmax.f32 %v2852, %v2390
      %v2854 = vmax.f32 %v2853, %v2396
      %v2855 = vmax.f32 %v2854, %v2400
      %v2856 = vmax.f32 %v2855, %v2406
      %v2857 = vmax.f32 %v2856, %v2410
      %v2858 = vmax.f32 %v2857, %v2416
      %v2859 = vmax.f32 %v2858, %v2420
      %v2860 = vmax.f32 %v2859, %v2426
      %v2861 = vmax.f32 %v2860, %v2430
      %v2862 = vmax.f32 %v2861, %v2436
      %v2863 = vmax.f32 %v2862, %v2440
      %v2864 = vmax.f32 %v2863, %v2446
      %v2865 = vmax.f32 %v2864, %v2450
      %v2866 = vmax.f32 %v2865, %v2456
      %v2867 = vmax.f32 %v2866, %v2460
      %v2868 = vmax.f32 %v2867, %v2466
      %v2869 = vmax.f32 %v2868, %v2470
      %v2870 = vmax.f32 %v2869, %v2476
      %v2871 = vmax.f32 %v2870, %v2480
      %v2872 = vmax.f32 %v2871, %v2486
      %v2873 = vmax.f32 %v2872, %v2490
      %v2874 = vmax.f32 %v2873, %v2496
      %v2875 = vmax.f32 %v2874, %v2500
      %v2876 = vmax.f32 %v2875, %v2506
      %v2877 = vmax.f32 %v2876, %v2510
      %v2878 = vmax.f32 %v2877, %v2516
      %v2879 = vmax.f32 %v2878, %v2520
      %v2880 = vmax.f32 %v2879, %v2526
      %v2881 = vmax.f32 %v2880, %v2530
      %v2882 = vmax.f32 %v2378, %v2382
      %v2883 = vmax.f32 %v2882, %v2388
      %v2884 = vmax.f32 %v2883, %v2392
      %v2885 = vmax.f32 %v2884, %v2398
      %v2886 = vmax.f32 %v2885, %v2402
      %v2887 = vmax.f32 %v2886, %v2408
      %v2888 = vmax.f32 %v2887, %v2412
      %v2889 = vmax.f32 %v2888, %v2418
      %v2890 = vmax.f32 %v2889, %v2422
      %v2891 = vmax.f32 %v2890, %v2428
      %v2892 = vmax.f32 %v2891, %v2432
      %v2893 = vmax.f32 %v2892, %v2438
      %v2894 = vmax.f32 %v2893, %v2442
      %v2895 = vmax.f32 %v2894, %v2448
      %v2896 = vmax.f32 %v2895, %v2452
      %v2897 = vmax.f32 %v2896, %v2458
      %v2898 = vmax.f32 %v2897, %v2462
      %v2899 = vmax.f32 %v2898, %v2468
      %v2900 = vmax.f32 %v2899, %v2472
      %v2901 = vmax.f32 %v2900, %v2478
      %v2902 = vmax.f32 %v2901, %v2482
      %v2903 = vmax.f32 %v2902, %v2488
      %v2904 = vmax.f32 %v2903, %v2492
      %v2905 = vmax.f32 %v2904, %v2498
      %v2906 = vmax.f32 %v2905, %v2502
      %v2907 = vmax.f32 %v2906, %v2508
      %v2908 = vmax.f32 %v2907, %v2512
      %v2909 = vmax.f32 %v2908, %v2518
      %v2910 = vmax.f32 %v2909, %v2522
      %v2911 = vmax.f32 %v2910, %v2528
      %v2912 = vmax.f32 %v2911, %v2532
      %v2913 = vmax.f32 %v2569, %v2573
      %v2914 = vmax.f32 %v2913, %v2579
      %v2915 = vmax.f32 %v2914, %v2583
      %v2916 = vmax.f32 %v2915, %v2589
      %v2917 = vmax.f32 %v2916, %v2593
      %v2918 = vmax.f32 %v2917, %v2599
      %v2919 = vmax.f32 %v2918, %v2603
      %v2920 = vmax.f32 %v2919, %v2609
      %v2921 = vmax.f32 %v2920, %v2613
      %v2922 = vmax.f32 %v2921, %v2619
      %v2923 = vmax.f32 %v2922, %v2623
      %v2924 = vmax.f32 %v2923, %v2629
      %v2925 = vmax.f32 %v2924, %v2633
      %v2926 = vmax.f32 %v2925, %v2639
      %v2927 = vmax.f32 %v2926, %v2643
      %v2928 = vmax.f32 %v2927, %v2649
      %v2929 = vmax.f32 %v2928, %v2653
      %v2930 = vmax.f32 %v2929, %v2659
      %v2931 = vmax.f32 %v2930, %v2663
      %v2932 = vmax.f32 %v2931, %v2669
      %v2933 = vmax.f32 %v2932, %v2673
      %v2934 = vmax.f32 %v2933, %v2679
      %v2935 = vmax.f32 %v2934, %v2683
      %v2936 = vmax.f32 %v2935, %v2689
      %v2937 = vmax.f32 %v2936, %v2693
      %v2938 = vmax.f32 %v2937, %v2699
      %v2939 = vmax.f32 %v2938, %v2703
      %v2940 = vmax.f32 %v2939, %v2709
      %v2941 = vmax.f32 %v2940, %v2713
      %v2942 = vmax.f32 %v2941, %v2719
      %v2943 = vmax.f32 %v2942, %v2723
      %v2944 = vmax.f32 %v2571, %v2575
      %v2945 = vmax.f32 %v2944, %v2581
      %v2946 = vmax.f32 %v2945, %v2585
      %v2947 = vmax.f32 %v2946, %v2591
      %v2948 = vmax.f32 %v2947, %v2595
      %v2949 = vmax.f32 %v2948, %v2601
      %v2950 = vmax.f32 %v2949, %v2605
      %v2951 = vmax.f32 %v2950, %v2611
      %v2952 = vmax.f32 %v2951, %v2615
      %v2953 = vmax.f32 %v2952, %v2621
      %v2954 = vmax.f32 %v2953, %v2625
      %v2955 = vmax.f32 %v2954, %v2631
      %v2956 = vmax.f32 %v2955, %v2635
      %v2957 = vmax.f32 %v2956, %v2641
      %v2958 = vmax.f32 %v2957, %v2645
      %v2959 = vmax.f32 %v2958, %v2651
      %v2960 = vmax.f32 %v2959, %v2655
      %v2961 = vmax.f32 %v2960, %v2661
      %v2962 = vmax.f32 %v2961, %v2665
      %v2963 = vmax.f32 %v2962, %v2671
      %v2964 = vmax.f32 %v2963, %v2675
      %v2965 = vmax.f32 %v2964, %v2681
      %v2966 = vmax.f32 %v2965, %v2685
      %v2967 = vmax.f32 %v2966, %v2691
      %v2968 = vmax.f32 %v2967, %v2695
      %v2969 = vmax.f32 %v2968, %v2701
      %v2970 = vmax.f32 %v2969, %v2705
      %v2971 = vmax.f32 %v2970, %v2711
      %v2972 = vmax.f32 %v2971, %v2715
      %v2973 = vmax.f32 %v2972, %v2721
      %v2974 = vmax.f32 %v2973, %v2725
      %v2975 = vld [vmem:[#allocation2] sm:$0xff]
      %v2976 = vld [vmem:[#allocation2 + $0x8] sm:$0xff]
      %v2977 = vld [vmem:[#allocation2 + $0x10] sm:$0xff]
      %v2978 = vld [vmem:[#allocation2 + $0x18] sm:$0xff]
      %v2979 = vld [vmem:[#allocation2 + $0x20] sm:$0xff]
      %v2980 = vld [vmem:[#allocation2 + $0x28] sm:$0xff]
      %v2981 = vld [vmem:[#allocation2 + $0x30] sm:$0xff]
      %v2982 = vld [vmem:[#allocation2 + $0x38] sm:$0xff]
      %v2983 = vmax.f32 %v2975, %v2757
      %v2984 = vmax.f32 %v2976, %v2788
      %v2985 = vmax.f32 %v2977, %v2819
      %v2986 = vmax.f32 %v2978, %v2850
      %v2987 = vmax.f32 %v2979, %v2881
      %v2988 = vmax.f32 %v2980, %v2912
      %v2989 = vmax.f32 %v2981, %v2943
      %v2990 = vmax.f32 %v2982, %v2974
      %2991 = vst [vmem:[#allocation2] sm:$0xff] %v2983
      %2992 = vst [vmem:[#allocation2 + $0x8] sm:$0xff] %v2984
      %2993 = vst [vmem:[#allocation2 + $0x10] sm:$0xff] %v2985
      %2994 = vst [vmem:[#allocation2 + $0x18] sm:$0xff] %v2986
      %2995 = vst [vmem:[#allocation2 + $0x20] sm:$0xff] %v2987
      %2996 = vst [vmem:[#allocation2 + $0x28] sm:$0xff] %v2988
      %2997 = vst [vmem:[#allocation2 + $0x30] sm:$0xff] %v2989
      %2998 = vst [vmem:[#allocation2 + $0x38] sm:$0xff] %v2990
      // Predicated region
      $region53: #{triangle_net_forward.1} parent=47 // pred_check
        %p2999 = pneg %p330
      $region54: #{triangle_net_forward.1} parent=47 // pred_check_branch
        %3001 = sbr.rel (%p2999) target = $region56
      $region55: #{triangle_net_forward.1} parent=47 // pred_region
        %v3002 = vld [vmem:[#allocation2] sm:$0xff]
        %v3003 = vld [vmem:[#allocation2 + $0x8] sm:$0xff]
        %v3004 = vld [vmem:[#allocation2 + $0x10] sm:$0xff]
        %v3005 = vld [vmem:[#allocation2 + $0x18] sm:$0xff]
        %v3006 = vld [vmem:[#allocation2 + $0x20] sm:$0xff]
        %v3007 = vld [vmem:[#allocation2 + $0x28] sm:$0xff]
        %v3008 = vld [vmem:[#allocation2 + $0x30] sm:$0xff]
        %v3009 = vld [vmem:[#allocation2 + $0x38] sm:$0xff]
        %v3010 = vrot.slane %v3002, 4
        %v3011 = vmax.f32 %v3002, %v3010
        %v3012 = vrot.slane %v3011, 2
        %v3013 = vmax.f32 %v3011, %v3012
        %v3014 = vrot.slane %v3013, 1
        %v3015 = vmax.f32 %v3013, %v3014
        %v3016 = vrot.slane %v3003, 4
        %v3017 = vmax.f32 %v3003, %v3016
        %v3018 = vrot.slane %v3017, 2
        %v3019 = vmax.f32 %v3017, %v3018
        %v3020 = vrot.slane %v3019, 1
        %v3021 = vmax.f32 %v3019, %v3020
        %v3022 = vrot.slane %v3004, 4
        %v3023 = vmax.f32 %v3004, %v3022
        %v3024 = vrot.slane %v3023, 2
        %v3025 = vmax.f32 %v3023, %v3024
        %v3026 = vrot.slane %v3025, 1
        %v3027 = vmax.f32 %v3025, %v3026
        %v3028 = vrot.slane %v3005, 4
        %v3029 = vmax.f32 %v3005, %v3028
        %v3030 = vrot.slane %v3029, 2
        %v3031 = vmax.f32 %v3029, %v3030
        %v3032 = vrot.slane %v3031, 1
        %v3033 = vmax.f32 %v3031, %v3032
        %v3034 = vrot.slane %v3006, 4
        %v3035 = vmax.f32 %v3006, %v3034
        %v3036 = vrot.slane %v3035, 2
        %v3037 = vmax.f32 %v3035, %v3036
        %v3038 = vrot.slane %v3037, 1
        %v3039 = vmax.f32 %v3037, %v3038
        %v3040 = vrot.slane %v3007, 4
        %v3041 = vmax.f32 %v3007, %v3040
        %v3042 = vrot.slane %v3041, 2
        %v3043 = vmax.f32 %v3041, %v3042
        %v3044 = vrot.slane %v3043, 1
        %v3045 = vmax.f32 %v3043, %v3044
        %v3046 = vrot.slane %v3008, 4
        %v3047 = vmax.f32 %v3008, %v3046
        %v3048 = vrot.slane %v3047, 2
        %v3049 = vmax.f32 %v3047, %v3048
        %v3050 = vrot.slane %v3049, 1
        %v3051 = vmax.f32 %v3049, %v3050
        %v3052 = vrot.slane %v3009, 4
        %v3053 = vmax.f32 %v3009, %v3052
        %v3054 = vrot.slane %v3053, 2
        %v3055 = vmax.f32 %v3053, %v3054
        %v3056 = vrot.slane %v3055, 1
        %v3057 = vmax.f32 %v3055, %v3056
        %v3066 = vcombine.low %v3015, %v3021
        %v3067 = vcombine.low %v3027, %v3033
        %v3068 = vcombine.low %v3039, %v3045
        %v3069 = vcombine.low %v3051, %v3057
        %v3071 = vunpack.c.l.s4 1966171168
        %v3072 = vunpack.c.0.s8 %v3071
        %v3073 = vlaneseq
        %v3074 = vshrl.u32 %v3073, 7
        %v3075 = vsub.s32 %v3072, %v3074
        %v3076 = vrot.slane %v3066, %v3075
        %v3078 = vunpack.c.l.s4 1966171168
        %v3079 = vunpack.c.0.s8 %v3078
        %v3080 = vlaneseq
        %v3081 = vshrl.u32 %v3080, 7
        %v3082 = vsub.s32 %v3079, %v3081
        %v3083 = vrot.slane %v3067, %v3082
        %v3085 = vunpack.c.l.s4 1966171168
        %v3086 = vunpack.c.0.s8 %v3085
        %v3087 = vlaneseq
        %v3088 = vshrl.u32 %v3087, 7
        %v3089 = vsub.s32 %v3086, %v3088
        %v3090 = vrot.slane %v3068, %v3089
        %v3092 = vunpack.c.l.s4 1966171168
        %v3093 = vunpack.c.0.s8 %v3092
        %v3094 = vlaneseq
        %v3095 = vshrl.u32 %v3094, 7
        %v3096 = vsub.s32 %v3093, %v3095
        %v3097 = vrot.slane %v3069, %v3096
        %v3098 = vcombine.low %v3076, %v3083
        %v3099 = vcombine.low %v3090, %v3097
        %v3101 = vunpack.c.l.s4 1966171168
        %v3102 = vunpack.c.0.s8 %v3101
        %v3103 = vlaneseq
        %v3104 = vshrl.u32 %v3103, 7
        %v3105 = vsub.s32 %v3102, %v3104
        %v3106 = vrot.slane %v3098, %v3105
        %v3108 = vunpack.c.l.s4 1966171168
        %v3109 = vunpack.c.0.s8 %v3108
        %v3110 = vlaneseq
        %v3111 = vshrl.u32 %v3110, 7
        %v3112 = vsub.s32 %v3109, %v3111
        %v3113 = vrot.slane %v3099, %v3112
        %v3114 = vcombine.low %v3106, %v3113
        %3116 = vst [vmem:[%s328] sm:$0xff] %v3114
      $region56: #{triangle_net_forward.1} parent=47 // pred_fallthru
        _
      %p3117 = scmp.lt.s32.totalorder %s23, 1
      %s3118 = scalar_select %p3117, %s23, 1
      %p3119 = scmp.lt.s32.totalorder %s24, 0
      %s3120 = scalar_select %p3119, %s24, 0
      %s3121 = smul.addr %s3120, 8
      %s3122 = smul.addr %s3118, 8
      %s3123 = sadd.s32 %s3121, %s3122
      %s3124 = scalar_lea.vmem %s7, %s3123
      // Predicated region
      $region57: #{triangle_net_forward.1} parent=47 // pred_check
        %p3125 = pneg %p213
      $region58: #{triangle_net_forward.1} parent=47 // pred_check_branch
        %3127 = sbr.rel (%p3125) target = $region60
      $region59: #{triangle_net_forward.1} parent=47 // pred_region
        _
      $region60: #{triangle_net_forward.1} parent=47 // pred_fallthru
        _
    $region48: #{triangle_net_forward.1} parent=5 // pred_fallthru
      _
    %p3128 = scmp.le.s32.totalorder 2, %s13
    // Predicated region
    $region61: #{triangle_net_forward.1} parent=5 // pred_check
      %p3129 = pneg %p3128
    $region62: #{triangle_net_forward.1} parent=5 // pred_check_branch
      %3131 = sbr.rel (%p3129) target = $region64
    $region63: #{triangle_net_forward.1} parent=5 // pred_region
      %s3132 = ssub.s32 %s13, 2
      // Predicated region
      $region65: #{triangle_net_forward.1} parent=63 // pred_check
        %p3133 = pneg %p219
      $region66: #{triangle_net_forward.1} parent=63 // pred_check_branch
        %3135 = sbr.rel (%p3133) target = $region68
      $region67: #{triangle_net_forward.1} parent=63 // pred_region
        %p3136 = scmp.lt.s32.totalorder %s26, 1
        %s3137 = scalar_select %p3136, %s26, 1
        %p3138 = scmp.lt.s32.totalorder %s27, 0
        %s3139 = scalar_select %p3138, %s27, 0
        %s3140 = smul.addr %s3139, 8
        %s3141 = smul.addr %s3137, 8
        %s3142 = sadd.s32 %s3140, %s3141
        %s3143 = scalar_lea.vmem %s7, %s3142
      $region68: #{triangle_net_forward.1} parent=63 // pred_fallthru
        _
    $region64: #{triangle_net_forward.1} parent=5 // pred_fallthru
      _
  $region6: #{triangle_net_forward.1} parent=0 // loop_footer
    %s17 = sadd.s32 1, %s13
  $region7: #{triangle_net_forward.1} parent=0 // loop_footer_branch
    %12 = sbr.rel target = $region3
  $region8: #{triangle_net_forward.1} parent=0 // loop_exit
    _

</llo_original>
